<compile_context>
chip_gen: v6e
topology: v6e:2x2x1
jax: 0.10.0
libtpu: 0.0.40
codegen_flags: <defaults>
</compile_context>

<pallas_src>
import functools

import jax
import jax.numpy as jnp
from jax.experimental import pallas as pl
from jax.experimental.pallas import tpu as pltpu


def _round_up(v, m):
    return ((v + m - 1) // m) * m


def _pick_row_tile(n_p, max_tile=512):
    """Largest multiple of 128 that divides n_p and is <= max_tile."""
    blocks = n_p // 128
    best = 1
    for t in range(1, min(blocks, max_tile // 128) + 1):
        if blocks % t == 0:
            best = t
    return 128 * best


def _gcn_kernel(x_ref, adj_ref, w1_ref, b1_ref, w2_ref, b2_ref, o_ref,
                s1_ref, h_ref, s2_ref):
    """Two-phase fused GCN.  grid = (layer, row_tile).

    Phase 0 (layer==0): h[i]   = relu(adj[i] @ (x @ W1) + b1)   (h kept in VMEM)
    Phase 1 (layer==1): out[i] = adj[i] @ (h @ W2) + b2
    All matmuls take bf16 operands with f32 accumulation.
    """
    layer = pl.program_id(0)
    i = pl.program_id(1)
    tm = adj_ref.shape[0]
    row0 = pl.multiple_of(i * tm, tm)

    # --- phase 0, first tile: s1 = x @ W1 (shared by all row tiles) ---
    @pl.when((layer == 0) & (i == 0))
    def _():
        s1 = jnp.dot(x_ref[...], w1_ref[...],
                     preferred_element_type=jnp.float32)
        s1_ref[...] = s1.astype(jnp.bfloat16)

    # --- phase 0: hidden row tile -> persistent VMEM scratch ---
    @pl.when(layer == 0)
    def _():
        acc = jnp.dot(adj_ref[...], s1_ref[...],
                      preferred_element_type=jnp.float32)
        h_t = jnp.maximum(acc + b1_ref[...], 0.0)
        # F.dropout(h, p, training=False) is the identity in eval mode.
        # TODO(synk): training-mode dropout (pltpu.prng_seed +
        # pltpu.prng_random_bits mask here) is not wired; eval mode only.
        h_ref[pl.ds(row0, tm), :] = h_t.astype(jnp.bfloat16)
        # Keep the phase-0 output writeback well-defined (rewritten in phase 1).
        o_ref[...] = jnp.zeros_like(o_ref)

    # --- phase 1, first tile: s2 = h @ W2 (shared by all row tiles) ---
    @pl.when((layer == 1) & (i == 0))
    def _():
        s2 = jnp.dot(h_ref[...], w2_ref[...],
                     preferred_element_type=jnp.float32)
        s2_ref[...] = s2.astype(jnp.bfloat16)

    # --- phase 1: output row tile ---
    @pl.when(layer == 1)
    def _():
        acc = jnp.dot(adj_ref[...], s2_ref[...],
                      preferred_element_type=jnp.float32)
        o_ref[...] = (acc + b2_ref[...]).astype(o_ref.dtype)


def gcn_prepare(adj, params):
    """One-time setup: pad adjacency + parameters and cast MXU operands to
    bf16.  adj / W / b are static across forward calls for a fixed graph, so
    the O(N^2) pad + cast is hoisted off the per-call path."""
    w1, b1, w2, b2 = params
    n = adj.shape[0]
    nfeat, nhid = w1.shape
    nout = w2.shape[1]

    n_p = _round_up(max(n, 128), 128)
    f_p = _round_up(nfeat, 128)
    h_p = _round_up(nhid, 128)   # pad to 256 on v6e/v7x once nhid >> 128
    o_p = _round_up(nout, 128)

    # Zero padding is exact: padded columns of adj are zero, so the nonzero
    # padded rows of h (= relu(b1)) never reach valid output rows.
    adj_p = jnp.pad(adj, ((0, n_p - n), (0, n_p - n))).astype(jnp.bfloat16)
    w1_p = jnp.pad(w1, ((0, f_p - nfeat), (0, h_p - nhid))).astype(jnp.bfloat16)
    w2_p = jnp.pad(w2, ((0, h_p - nhid), (0, o_p - nout))).astype(jnp.bfloat16)
    b1_p = jnp.pad(b1, ((0, 0), (0, h_p - nhid))).astype(jnp.float32)
    b2_p = jnp.pad(b2, ((0, 0), (0, o_p - nout))).astype(jnp.float32)

    dims = dict(n=n, nfeat=nfeat, nout=nout, n_p=n_p, f_p=f_p, h_p=h_p, o_p=o_p)
    return (adj_p, w1_p, b1_p, w2_p, b2_p), dims


def make_gcn_forward(adj, params, dropout_p=0.0, training=False):
    """Returns a jitted forward(x) for a fixed graph (adj) and parameters."""
    if training and dropout_p > 0.0:
        raise NotImplementedError("training-mode dropout not implemented")

    (adj_p, w1_p, b1_p, w2_p, b2_p), d = gcn_prepare(adj, params)
    n, nfeat, nout = d["n"], d["nfeat"], d["nout"]
    n_p, f_p, h_p, o_p = d["n_p"], d["f_p"], d["h_p"], d["o_p"]

    tm = _pick_row_tile(n_p)
    n_tiles = n_p // tm

    flops = (2 * n_p * f_p * h_p + 2 * n_p * n_p * h_p
             + 2 * n_p * h_p * o_p + 2 * n_p * n_p * o_p)
    bytes_accessed = (2 * n_p * n_p * 2                       # adj, once per layer
                      + (n_p * f_p + f_p * h_p + h_p * o_p) * 2
                      + (h_p + o_p) * 4
                      + 2 * n_p * o_p * 4)                    # out written both phases

    est_vmem = ((n_p * f_p + f_p * h_p + h_p * o_p) * 2       # resident operands
                + (h_p + o_p) * 4                             # biases
                + (2 * n_p * h_p + n_p * o_p) * 2             # s1, h, s2 scratch
                + 2 * tm * n_p * 2                            # double-buffered adj tile
                + 2 * tm * o_p * 4)                           # double-buffered out tile
    vmem_limit = min(max(3 * est_vmem, 32 * 1024 * 1024), 60 * 1024 * 1024)

    vmem_full = pl.BlockSpec(memory_space=pltpu.MemorySpace.VMEM)
    grid_spec = pltpu.PrefetchScalarGridSpec(
        num_scalar_prefetch=0,
        grid=(2, n_tiles),
        in_specs=[
            vmem_full,                                       # x (resident)
            pl.BlockSpec((tm, n_p), lambda l, i: (i, 0)),    # adj row tile (pipelined)
            vmem_full, vmem_full, vmem_full, vmem_full,      # W1, b1, W2, b2
        ],
        out_specs=pl.BlockSpec((tm, o_p), lambda l, i: (i, 0)),
        scratch_shapes=[
            pltpu.VMEM((n_p, h_p), jnp.bfloat16),   # s1 = x @ W1
            pltpu.VMEM((n_p, h_p), jnp.bfloat16),   # h  = relu(adj @ s1 + b1)
            pltpu.VMEM((n_p, o_p), jnp.bfloat16),   # s2 = h @ W2
        ],
    )

    kernel_fn = pl.pallas_call(
        _gcn_kernel,
        out_shape=jax.ShapeDtypeStruct((n_p, o_p), jnp.float32),
        grid_spec=grid_spec,
        compiler_params=pltpu.CompilerParams(
            # Row tiles share the h/s1/s2 scratch across both phases, so the
            # grid must stay sequential (see module comment re v7x megacore).
            dimension_semantics=("arbitrary", "arbitrary"),
            vmem_limit_bytes=vmem_limit,
        ),
        cost_estimate=pl.CostEstimate(flops=flops, transcendentals=0,
                                      bytes_accessed=bytes_accessed),
    )

    @jax.jit
    def forward(x):
        x_p = jnp.pad(x, ((0, n_p - x.shape[0]), (0, f_p - x.shape[1])))
        x_p = x_p.astype(jnp.bfloat16)
        out_p = kernel_fn(x_p, adj_p, w1_p, b1_p, w2_p, b2_p)
        return out_p[:n, :nout]

    return forward


def init_gcn_params(key, nfeat, nhid, nout):
    """Deterministic init matching GraphConvolution.reset_parameters:
    uniform(-stdv, stdv) with stdv = 1/sqrt(out_features)."""
    k1, k2, k3, k4 = jax.random.split(key, 4)
    stdv1 = 1.0 / (nhid ** 0.5)
    stdv2 = 1.0 / (nout ** 0.5)
    w1 = jax.random.uniform(k1, (nfeat, nhid), jnp.float32, -stdv1, stdv1)
    b1 = jax.random.uniform(k2, (1, nhid), jnp.float32, -stdv1, stdv1)
    w2 = jax.random.uniform(k3, (nhid, nout), jnp.float32, -stdv2, stdv2)
    b2 = jax.random.uniform(k4, (1, nout), jnp.float32, -stdv2, stdv2)
    return w1, b1, w2, b2


if __name__ == "__main__":
    key = jax.random.PRNGKey(0)
    k_x, k_adj, k_p = jax.random.split(key, 3)

    # Small GCN: 8 nodes, nfeat=16, nhid=32, nout=8, dropout=0.5 (eval mode).
    N, nfeat, nhid, nout = 8, 16, 32, 8
    dropout_p = 0.5

    x = jax.random.normal(k_x, (N, nfeat), jnp.float32)

    # Symmetric row-normalized adjacency with self-loops (typical GCN input).
    a = jax.random.uniform(k_adj, (N, N), jnp.float32)
    a = (a + a.T) * 0.5 + jnp.eye(N, dtype=jnp.float32)
    adj = a / jnp.sum(a, axis=1, keepdims=True)

    params = init_gcn_params(k_p, nfeat, nhid, nout)

    forward = make_gcn_forward(adj, params, dropout_p, training=False)
    out = jax.block_until_ready(forward(x))

    # Pure-JAX f32 reference check (kernel uses bf16 MXU operands with f32
    # accumulation, so tolerance is loosened accordingly).
    w1, b1, w2, b2 = params
    h_ref = jnp.maximum(adj @ (x @ w1) + b1, 0.0)
    out_ref = adj @ (h_ref @ w2) + b2
    assert out.shape == (N, nout)
    assert jnp.allclose(out, out_ref, atol=5e-2, rtol=5e-2), float(
        jnp.max(jnp.abs(out - out_ref)))

    print("KERNEL_OK")
</pallas_src>

<mosaic_0001>
module attributes {stable_mosaic.version = 11 : i64} {
  func.func @_gcn_kernel(%arg0: i32, %arg1: i32, %arg2: memref<128x128xbf16, #tpu.memory_space<vmem>>, %arg3: memref<128x128xbf16, #tpu.memory_space<vmem>>, %arg4: memref<128x128xbf16, #tpu.memory_space<vmem>>, %arg5: memref<1x128xf32, #tpu.memory_space<vmem>>, %arg6: memref<128x128xbf16, #tpu.memory_space<vmem>>, %arg7: memref<1x128xf32, #tpu.memory_space<vmem>>, %arg8: memref<128x128xf32, #tpu.memory_space<vmem>>, %arg9: memref<128x128xbf16, #tpu.memory_space<vmem>>, %arg10: memref<128x128xbf16, #tpu.memory_space<vmem>>, %arg11: memref<128x128xbf16, #tpu.memory_space<vmem>>) attributes {dimension_semantics = [#tpu.dimension_semantics<arbitrary>, #tpu.dimension_semantics<arbitrary>], iteration_bounds = array<i64: 2, 1>, scalar_prefetch = 0 : i64, scratch_operands = 3 : i64, tpu.core_type = #tpu.core_type<tc>, window_params = [{pipeline_mode = #tpu.pipeline_mode<synchronous>, transform_indices = @transform_0, window_bounds = array<i64: 128, 128>}, {transform_indices = @transform_1, window_bounds = array<i64: 128, 128>}, {pipeline_mode = #tpu.pipeline_mode<synchronous>, transform_indices = @transform_2, window_bounds = array<i64: 128, 128>}, {pipeline_mode = #tpu.pipeline_mode<synchronous>, transform_indices = @transform_3, window_bounds = array<i64: 1, 128>}, {pipeline_mode = #tpu.pipeline_mode<synchronous>, transform_indices = @transform_4, window_bounds = array<i64: 128, 128>}, {pipeline_mode = #tpu.pipeline_mode<synchronous>, transform_indices = @transform_5, window_bounds = array<i64: 1, 128>}, {transform_indices = @transform_6, window_bounds = array<i64: 128, 128>}]} {
    %c128_i32 = arith.constant 128 : i32
    %0 = arith.muli %arg1, %c128_i32 : i32
    %1 = tpu.assume_multiple %0, 128 : i32
    %c0_i32 = arith.constant 0 : i32
    %2 = arith.cmpi eq, %arg0, %c0_i32 : i32
    %c0_i32_0 = arith.constant 0 : i32
    %3 = arith.cmpi eq, %arg1, %c0_i32_0 : i32
    %4 = arith.andi %2, %3 : i1
    %5 = arith.extui %4 : i1 to i32
    %c0_i32_1 = arith.constant 0 : i32
    %6 = arith.cmpi ne, %5, %c0_i32_1 : i32
    scf.if %6 {
      %c0 = arith.constant 0 : index
      %c0_8 = arith.constant 0 : index
      %18 = vector.load %arg2[%c0, %c0_8] : memref<128x128xbf16, #tpu.memory_space<vmem>>, vector<128x128xbf16>
      %c0_9 = arith.constant 0 : index
      %c0_10 = arith.constant 0 : index
      %19 = vector.load %arg4[%c0_9, %c0_10] : memref<128x128xbf16, #tpu.memory_space<vmem>>, vector<128x128xbf16>
      %cst = arith.constant dense<0.000000e+00> : vector<128x128xf32>
      %20 = tpu.matmul %18, %19, %cst {dimension_numbers = #tpu.dot_dimension_numbers<[1], [0], [0], [1], [0, 0, 1, 1], [], []>} : vector<128x128xbf16>, vector<128x128xbf16>, vector<128x128xf32> -> vector<128x128xf32>
      %21 = arith.truncf %20 : vector<128x128xf32> to vector<128x128xbf16>
      %c0_11 = arith.constant 0 : index
      %c0_12 = arith.constant 0 : index
      %22 = vector.load %arg9[%c0_11, %c0_12] : memref<128x128xbf16, #tpu.memory_space<vmem>>, vector<128x128xbf16>
      tpu.vector_store %arg9[%c0_11, %c0_12], %21 {strides = array<i32>} : memref<128x128xbf16, #tpu.memory_space<vmem>>, vector<128x128xbf16>,
    } else {
    }
    %c0_i32_2 = arith.constant 0 : i32
    %7 = arith.cmpi eq, %arg0, %c0_i32_2 : i32
    %8 = arith.extui %7 : i1 to i32
    %c0_i32_3 = arith.constant 0 : i32
    %9 = arith.cmpi ne, %8, %c0_i32_3 : i32
    scf.if %9 {
      %c0 = arith.constant 0 : index
      %c0_8 = arith.constant 0 : index
      %18 = vector.load %arg3[%c0, %c0_8] : memref<128x128xbf16, #tpu.memory_space<vmem>>, vector<128x128xbf16>
      %c0_9 = arith.constant 0 : index
      %c0_10 = arith.constant 0 : index
      %19 = vector.load %arg9[%c0_9, %c0_10] : memref<128x128xbf16, #tpu.memory_space<vmem>>, vector<128x128xbf16>
      %cst = arith.constant dense<0.000000e+00> : vector<128x128xf32>
      %20 = tpu.matmul %18, %19, %cst {dimension_numbers = #tpu.dot_dimension_numbers<[1], [0], [0], [1], [0, 0, 1, 1], [], []>} : vector<128x128xbf16>, vector<128x128xbf16>, vector<128x128xf32> -> vector<128x128xf32>
      %c0_11 = arith.constant 0 : index
      %c0_12 = arith.constant 0 : index
      %21 = vector.load %arg5[%c0_11, %c0_12] : memref<1x128xf32, #tpu.memory_space<vmem>>, vector<1x128xf32>
      %22 = vector.broadcast %21 : vector<1x128xf32> to vector<128x128xf32>
      %23 = arith.addf %20, %22 : vector<128x128xf32>
      %cst_13 = arith.constant 0.000000e+00 : f32
      %24 = vector.broadcast %cst_13 : f32 to vector<128x128xf32>
      %25 = arith.maximumf %23, %24 : vector<128x128xf32>
      %26 = arith.truncf %25 : vector<128x128xf32> to vector<128x128xbf16>
      %27 = arith.index_cast %1 : i32 to index
      %c0_14 = arith.constant 0 : index
      %28 = vector.load %arg10[%27, %c0_14] : memref<128x128xbf16, #tpu.memory_space<vmem>>, vector<128x128xbf16>
      tpu.vector_store %arg10[%27, %c0_14], %26 {strides = array<i32>} : memref<128x128xbf16, #tpu.memory_space<vmem>>, vector<128x128xbf16>,
      %cst_15 = arith.constant 0.000000e+00 : f32
      %29 = vector.broadcast %cst_15 : f32 to vector<128x128xf32>
      %c0_16 = arith.constant 0 : index
      %c0_17 = arith.constant 0 : index
      %30 = vector.load %arg8[%c0_16, %c0_17] : memref<128x128xf32, #tpu.memory_space<vmem>>, vector<128x128xf32>
      tpu.vector_store %arg8[%c0_16, %c0_17], %29 {strides = array<i32>} : memref<128x128xf32, #tpu.memory_space<vmem>>, vector<128x128xf32>,
    } else {
    }
    %c1_i32 = arith.constant 1 : i32
    %10 = arith.cmpi eq, %arg0, %c1_i32 : i32
    %c0_i32_4 = arith.constant 0 : i32
    %11 = arith.cmpi eq, %arg1, %c0_i32_4 : i32
    %12 = arith.andi %10, %11 : i1
    %13 = arith.extui %12 : i1 to i32
    %c0_i32_5 = arith.constant 0 : i32
    %14 = arith.cmpi ne, %13, %c0_i32_5 : i32
    scf.if %14 {
      %c0 = arith.constant 0 : index
      %c0_8 = arith.constant 0 : index
      %18 = vector.load %arg10[%c0, %c0_8] : memref<128x128xbf16, #tpu.memory_space<vmem>>, vector<128x128xbf16>
      %c0_9 = arith.constant 0 : index
      %c0_10 = arith.constant 0 : index
      %19 = vector.load %arg6[%c0_9, %c0_10] : memref<128x128xbf16, #tpu.memory_space<vmem>>, vector<128x128xbf16>
      %cst = arith.constant dense<0.000000e+00> : vector<128x128xf32>
      %20 = tpu.matmul %18, %19, %cst {dimension_numbers = #tpu.dot_dimension_numbers<[1], [0], [0], [1], [0, 0, 1, 1], [], []>} : vector<128x128xbf16>, vector<128x128xbf16>, vector<128x128xf32> -> vector<128x128xf32>
      %21 = arith.truncf %20 : vector<128x128xf32> to vector<128x128xbf16>
      %c0_11 = arith.constant 0 : index
      %c0_12 = arith.constant 0 : index
      %22 = vector.load %arg11[%c0_11, %c0_12] : memref<128x128xbf16, #tpu.memory_space<vmem>>, vector<128x128xbf16>
      tpu.vector_store %arg11[%c0_11, %c0_12], %21 {strides = array<i32>} : memref<128x128xbf16, #tpu.memory_space<vmem>>, vector<128x128xbf16>,
    } else {
    }
    %c1_i32_6 = arith.constant 1 : i32
    %15 = arith.cmpi eq, %arg0, %c1_i32_6 : i32
    %16 = arith.extui %15 : i1 to i32
    %c0_i32_7 = arith.constant 0 : i32
    %17 = arith.cmpi ne, %16, %c0_i32_7 : i32
    scf.if %17 {
      %c0 = arith.constant 0 : index
      %c0_8 = arith.constant 0 : index
      %18 = vector.load %arg3[%c0, %c0_8] : memref<128x128xbf16, #tpu.memory_space<vmem>>, vector<128x128xbf16>
      %c0_9 = arith.constant 0 : index
      %c0_10 = arith.constant 0 : index
      %19 = vector.load %arg11[%c0_9, %c0_10] : memref<128x128xbf16, #tpu.memory_space<vmem>>, vector<128x128xbf16>
      %cst = arith.constant dense<0.000000e+00> : vector<128x128xf32>
      %20 = tpu.matmul %18, %19, %cst {dimension_numbers = #tpu.dot_dimension_numbers<[1], [0], [0], [1], [0, 0, 1, 1], [], []>} : vector<128x128xbf16>, vector<128x128xbf16>, vector<128x128xf32> -> vector<128x128xf32>
      %c0_11 = arith.constant 0 : index
      %c0_12 = arith.constant 0 : index
      %21 = vector.load %arg7[%c0_11, %c0_12] : memref<1x128xf32, #tpu.memory_space<vmem>>, vector<1x128xf32>
      %22 = vector.broadcast %21 : vector<1x128xf32> to vector<128x128xf32>
      %23 = arith.addf %20, %22 : vector<128x128xf32>
      %c0_13 = arith.constant 0 : index
      %c0_14 = arith.constant 0 : index
      %24 = vector.load %arg8[%c0_13, %c0_14] : memref<128x128xf32, #tpu.memory_space<vmem>>, vector<128x128xf32>
      tpu.vector_store %arg8[%c0_13, %c0_14], %23 {strides = array<i32>} : memref<128x128xf32, #tpu.memory_space<vmem>>, vector<128x128xf32>,
    } else {
    }
    return
  }
  func.func @transform_0(%arg0: i32, %arg1: i32) -> (i32, i32) {
    %c0_i32 = arith.constant 0 : i32
    %c0_i32_0 = arith.constant 0 : i32
    %c0_i32_1 = arith.constant 0 : i32
    return %c0_i32, %c0_i32_0 : i32, i32
  }
  func.func @transform_1(%arg0: i32, %arg1: i32) -> (i32, i32) {
    %c0_i32 = arith.constant 0 : i32
    %c0_i32_0 = arith.constant 0 : i32
    return %arg1, %c0_i32 : i32, i32
  }
  func.func @transform_2(%arg0: i32, %arg1: i32) -> (i32, i32) {
    %c0_i32 = arith.constant 0 : i32
    %c0_i32_0 = arith.constant 0 : i32
    %c0_i32_1 = arith.constant 0 : i32
    return %c0_i32, %c0_i32_0 : i32, i32
  }
  func.func @transform_3(%arg0: i32, %arg1: i32) -> (i32, i32) {
    %c0_i32 = arith.constant 0 : i32
    %c0_i32_0 = arith.constant 0 : i32
    %c0_i32_1 = arith.constant 0 : i32
    return %c0_i32, %c0_i32_0 : i32, i32
  }
  func.func @transform_4(%arg0: i32, %arg1: i32) -> (i32, i32) {
    %c0_i32 = arith.constant 0 : i32
    %c0_i32_0 = arith.constant 0 : i32
    %c0_i32_1 = arith.constant 0 : i32
    return %c0_i32, %c0_i32_0 : i32, i32
  }
  func.func @transform_5(%arg0: i32, %arg1: i32) -> (i32, i32) {
    %c0_i32 = arith.constant 0 : i32
    %c0_i32_0 = arith.constant 0 : i32
    %c0_i32_1 = arith.constant 0 : i32
    return %c0_i32, %c0_i32_0 : i32, i32
  }
  func.func @transform_6(%arg0: i32, %arg1: i32) -> (i32, i32) {
    %c0_i32 = arith.constant 0 : i32
    %c0_i32_0 = arith.constant 0 : i32
    return %arg1, %c0_i32 : i32, i32
  }
}

</mosaic_0001>

<llo_original>
// kernel: forward.1
$region0: #{forward.1}
  #allocation0 [shape = 'u32[]', space=smem, size = 0x4, offset = 0x4, fixed_abs, tag = 'smem constant byte address 0x4 - core index']
  #allocation1 [shape = 'u32[144,128]{1,0:T(1,128)}', space=vmem, size = 0x12000, scoped, tag = 'internal scratch']
  #allocation2 [shape = 'bf16[128,128]{1,0:T(8,128)(2,1)}', space=vmem, size = 0x8000, scoped, tag = 'scratch operand']
  #allocation3 [shape = 'bf16[128,128]{1,0:T(8,128)(2,1)}', space=vmem, size = 0x8000, scoped, tag = 'scratch operand']
  #allocation4 [shape = 'bf16[128,128]{1,0:T(8,128)(2,1)}', space=vmem, size = 0x8000, scoped, tag = 'scratch operand']
  %s0 = inlined_call_operand.vmem [shape: bf16[128,128], index: 0, kind: input, shape index: {}]
  %s1 = inlined_call_operand.hbm [shape: bf16[128,128], index: 1, kind: input, shape index: {}]
  %s2 = inlined_call_operand.hbm [shape: bf16[128,128], index: 2, kind: input, shape index: {}]
  %s3 = inlined_call_operand.vmem [shape: f32[1,128], index: 3, kind: input, shape index: {}]
  %s4 = inlined_call_operand.vmem [shape: bf16[128,128], index: 4, kind: input, shape index: {}]
  %s5 = inlined_call_operand.vmem [shape: f32[1,128], index: 5, kind: input, shape index: {}]
  %s6 = inlined_call_operand.vmem [shape: f32[128,128], index: 6, kind: output, shape index: {}]
  %s7 = sld [smem:[#allocation0]]
  $region81: #{forward.1} parent=0
    _
  %s9 = ssub.s32 1, %s7
  %s10 = scalar_select 0, %s9, %s7
  $region1: #{forward.1} parent=0
    #allocation5 [shape = 'u8[32768]{0}', space=vmem, size = 0x8000, scoped, tag = 'input window, operand 1, single buffered']
    #allocation6 [shape = 's32[2]{0}', space=sflag, size = 0x8, scoped, tag = 'scoped memory for forward.1']
    #allocation7 [shape = 'u8[32768]{0}', space=vmem, size = 0x8000, scoped, tag = 'input window, operand 2, single buffered']
    #allocation8 [shape = 's32[1]{0}', space=sflag, size = 0x4, scoped, tag = 'scoped memory for forward.1']
    %11 = vsyncpa [#allocation6], 0
    %12 = vsyncpa [#allocation8], 0
    loop: start=0, step=1, limit=4
    $region2: #{forward.1} parent=1 // loop_pre_header
      _
    $region3: #{forward.1} parent=1 // loop_header
      %s14 = sphi 0, %s18
      %p15 = scmp.ge.s32.totalorder %s14, 4
      %s21 = sphi 0, %s33
      %s22 = sphi 0, %s29
      %s23 = sphi 0, %s21
      %s24 = sphi 0, %s22
      %s25 = sphi 0, %s23
      %s26 = sphi 0, %s24
      %s34 = sphi 0, %s34
      %s36 = sphi 0, %s34
      %s37 = sphi 0, %s36
      %s51 = sphi 0, %s37
      %s57 = sphi 0, %s59
      %s60 = sphi 0, %s57
      %s61 = sphi 0, %s60
      %s77 = sphi 0, %s61
      %s81 = sphi 0, %s81
      %s83 = sphi 0, %s81
      %s84 = sphi 0, %s83
      %s98 = sphi 0, %s84
      %s102 = sphi 0, %s102
      %s104 = sphi 0, %s102
      %s105 = sphi 0, %s104
      %s119 = sphi 0, %s105
      %s123 = sphi 0, %s123
      %s125 = sphi 0, %s123
      %s126 = sphi 0, %s125
      %s140 = sphi 0, %s126
      %s144 = sphi 0, %s144
      %s146 = sphi 0, %s144
      %s147 = sphi 0, %s146
      %s161 = sphi 0, %s147
      %s167 = sphi 0, %s169
      %s170 = sphi 0, %s167
      %s171 = sphi 0, %s170
      %s187 = sphi 0, %s171
    $region4: #{forward.1} parent=1 // loop_header_branch
      %17 = sbr.rel (%p15) target = $region8
    $region5: #{forward.1} parent=1 // loop_body
      %s19 = ssub.s32 %s14, 1
      %s20 = ssub.s32 %s14, 2
      %s27 = sadd.s32 1, %s22
      %p28 = scmp.ge.s32.totalorder %s27, 1
      %s29 = scalar_select %p28, 0, %s27
      %s30 = sadd.s32 1, %s21
      %s31 = scalar_select %p28, %s30, %s21
      %p32 = scmp.ge.s32.totalorder %s31, 2
      %s33 = scalar_select %p32, 0, %s31
      %s35 = sadd.s32 %s34, 1
      %p38 = scmp.eq.s32.totalorder %s14, 1
      %p39 = scmp.ne.s32.totalorder %s34, %s36
      %p40 = scmp.eq.s32.totalorder %s14, 0
      %p41 = por %p39, %p40
      %p42 = scmp.ne.s32.totalorder %s34, %s36
      %p43 = scmp.eq.s32.totalorder %s19, 1
      %p44 = por %p42, %p43
      %p45 = scmp.ne.s32.totalorder %s36, %s37
      %p46 = scmp.eq.s32.totalorder %s19, 0
      %p47 = por %p45, %p46
      %p48 = scmp.ne.s32.totalorder %s36, %s37
      %p49 = scmp.eq.s32.totalorder %s20, 1
      %p50 = por %p48, %p49
      %p52 = scmp.ne.s32.totalorder %s37, %s51
      %p53 = scmp.eq.s32.totalorder %s20, 0
      %p54 = por %p52, %p53
      %s55 = ssub.s32 %s22, %s29
      %p56 = scmp.eq.s32.totalorder %s55, 0
      %s58 = sadd.s32 %s57, 1
      %s59 = scalar_select %p56, %s57, %s58
      %p62 = pneg %p56
      %p63 = scmp.eq.s32.totalorder %s14, 1
      %p64 = por %p62, %p63
      %p65 = scmp.ne.s32.totalorder %s57, %s60
      %p66 = scmp.eq.s32.totalorder %s14, 0
      %p67 = por %p65, %p66
      %p68 = scmp.ne.s32.totalorder %s57, %s60
      %p69 = scmp.eq.s32.totalorder %s19, 1
      %p70 = por %p68, %p69
      %p71 = scmp.ne.s32.totalorder %s60, %s61
      %p72 = scmp.eq.s32.totalorder %s19, 0
      %p73 = por %p71, %p72
      %p74 = scmp.ne.s32.totalorder %s60, %s61
      %p75 = scmp.eq.s32.totalorder %s20, 1
      %p76 = por %p74, %p75
      %p78 = scmp.ne.s32.totalorder %s61, %s77
      %p79 = scmp.eq.s32.totalorder %s20, 0
      %p80 = por %p78, %p79
      %s82 = sadd.s32 %s81, 1
      %p85 = scmp.eq.s32.totalorder %s14, 1
      %p86 = scmp.ne.s32.totalorder %s81, %s83
      %p87 = scmp.eq.s32.totalorder %s14, 0
      %p88 = por %p86, %p87
      %p89 = scmp.ne.s32.totalorder %s81, %s83
      %p90 = scmp.eq.s32.totalorder %s19, 1
      %p91 = por %p89, %p90
      %p92 = scmp.ne.s32.totalorder %s83, %s84
      %p93 = scmp.eq.s32.totalorder %s19, 0
      %p94 = por %p92, %p93
      %p95 = scmp.ne.s32.totalorder %s83, %s84
      %p96 = scmp.eq.s32.totalorder %s20, 1
      %p97 = por %p95, %p96
      %p99 = scmp.ne.s32.totalorder %s84, %s98
      %p100 = scmp.eq.s32.totalorder %s20, 0
      %p101 = por %p99, %p100
      %s103 = sadd.s32 %s102, 1
      %p106 = scmp.eq.s32.totalorder %s14, 1
      %p107 = scmp.ne.s32.totalorder %s102, %s104
      %p108 = scmp.eq.s32.totalorder %s14, 0
      %p109 = por %p107, %p108
      %p110 = scmp.ne.s32.totalorder %s102, %s104
      %p111 = scmp.eq.s32.totalorder %s19, 1
      %p112 = por %p110, %p111
      %p113 = scmp.ne.s32.totalorder %s104, %s105
      %p114 = scmp.eq.s32.totalorder %s19, 0
      %p115 = por %p113, %p114
      %p116 = scmp.ne.s32.totalorder %s104, %s105
      %p117 = scmp.eq.s32.totalorder %s20, 1
      %p118 = por %p116, %p117
      %p120 = scmp.ne.s32.totalorder %s105, %s119
      %p121 = scmp.eq.s32.totalorder %s20, 0
      %p122 = por %p120, %p121
      %s124 = sadd.s32 %s123, 1
      %p127 = scmp.eq.s32.totalorder %s14, 1
      %p128 = scmp.ne.s32.totalorder %s123, %s125
      %p129 = scmp.eq.s32.totalorder %s14, 0
      %p130 = por %p128, %p129
      %p131 = scmp.ne.s32.totalorder %s123, %s125
      %p132 = scmp.eq.s32.totalorder %s19, 1
      %p133 = por %p131, %p132
      %p134 = scmp.ne.s32.totalorder %s125, %s126
      %p135 = scmp.eq.s32.totalorder %s19, 0
      %p136 = por %p134, %p135
      %p137 = scmp.ne.s32.totalorder %s125, %s126
      %p138 = scmp.eq.s32.totalorder %s20, 1
      %p139 = por %p137, %p138
      %p141 = scmp.ne.s32.totalorder %s126, %s140
      %p142 = scmp.eq.s32.totalorder %s20, 0
      %p143 = por %p141, %p142
      %s145 = sadd.s32 %s144, 1
      %p148 = scmp.eq.s32.totalorder %s14, 1
      %p149 = scmp.ne.s32.totalorder %s144, %s146
      %p150 = scmp.eq.s32.totalorder %s14, 0
      %p151 = por %p149, %p150
      %p152 = scmp.ne.s32.totalorder %s144, %s146
      %p153 = scmp.eq.s32.totalorder %s19, 1
      %p154 = por %p152, %p153
      %p155 = scmp.ne.s32.totalorder %s146, %s147
      %p156 = scmp.eq.s32.totalorder %s19, 0
      %p157 = por %p155, %p156
      %p158 = scmp.ne.s32.totalorder %s146, %s147
      %p159 = scmp.eq.s32.totalorder %s20, 1
      %p160 = por %p158, %p159
      %p162 = scmp.ne.s32.totalorder %s147, %s161
      %p163 = scmp.eq.s32.totalorder %s20, 0
      %p164 = por %p162, %p163
      %s165 = ssub.s32 %s22, %s29
      %p166 = scmp.eq.s32.totalorder %s165, 0
      %s168 = sadd.s32 %s167, 1
      %s169 = scalar_select %p166, %s167, %s168
      %p172 = pneg %p166
      %p173 = scmp.eq.s32.totalorder %s14, 1
      %p174 = por %p172, %p173
      %p175 = scmp.ne.s32.totalorder %s167, %s170
      %p176 = scmp.eq.s32.totalorder %s14, 0
      %p177 = por %p175, %p176
      %p178 = scmp.ne.s32.totalorder %s167, %s170
      %p179 = scmp.eq.s32.totalorder %s19, 1
      %p180 = por %p178, %p179
      %p181 = scmp.ne.s32.totalorder %s170, %s171
      %p182 = scmp.eq.s32.totalorder %s19, 0
      %p183 = por %p181, %p182
      %p184 = scmp.ne.s32.totalorder %s170, %s171
      %p185 = scmp.eq.s32.totalorder %s20, 1
      %p186 = por %p184, %p185
      %p188 = scmp.ne.s32.totalorder %s171, %s187
      %p189 = scmp.eq.s32.totalorder %s20, 0
      %p190 = por %p188, %p189
      %p191 = scmp.le.s32.totalorder 1, %s14
      %p192 = scmp.lt.s32.totalorder %s14, 3
      %p193 = pnand %p191, %p192
      %p194 = pneg %p193
      // Predicated region
      $region9: #{forward.1} parent=5 // pred_check
        _
      $region10: #{forward.1} parent=5 // pred_check_branch
        %196 = sbr.rel (%p193) target = $region12
      $region11: #{forward.1} parent=5 // pred_region
        %s197 = ssub.s32 %s14, 1
        // Predicated region
        $region13: #{forward.1} parent=11 // pred_check
          %p198 = pneg %p47
        $region14: #{forward.1} parent=11 // pred_check_branch
          %200 = sbr.rel (%p198) target = $region16
        $region15: #{forward.1} parent=11 // pred_region
          _
        $region16: #{forward.1} parent=11 // pred_fallthru
          _
        // Predicated region
        $region17: #{forward.1} parent=11 // pred_check
          %p201 = pneg %p73
        $region18: #{forward.1} parent=11 // pred_check_branch
          %203 = sbr.rel (%p201) target = $region20
        $region19: #{forward.1} parent=11 // pred_region
          %s204 = smul.u32 16, %s24
          %s206 = ssub.s32 1024, 1024
          %207 = vsyncadd [#allocation6], %s206
          %s208 = smul.addr %s204, 64
          %s209 = scalar_lea.hbm %s1, %s208
          %s210 = sshll.u32 [#allocation5], 4
          %s211 = int_to_ptr.vmem [resolvable:$true] %s210
          %216 = dma.hbm_to_vmem [thread:$0]  %s209, 1024, %s211, [#allocation6], 64, 64, 4
        $region20: #{forward.1} parent=11 // pred_fallthru
          _
        // Predicated region
        $region21: #{forward.1} parent=11 // pred_check
          %p217 = pneg %p94
        $region22: #{forward.1} parent=11 // pred_check_branch
          %219 = sbr.rel (%p217) target = $region24
        $region23: #{forward.1} parent=11 // pred_region
          %s221 = ssub.s32 1024, 1024
          %222 = vsyncadd [#allocation8], %s221
          %s223 = sshll.u32 [#allocation7], 4
          %s224 = int_to_ptr.vmem [resolvable:$true] %s223
          %229 = dma.hbm_to_vmem [thread:$0]  %s2, 1024, %s224, [#allocation8], 64, 64, 4
        $region24: #{forward.1} parent=11 // pred_fallthru
          _
        // Predicated region
        $region25: #{forward.1} parent=11 // pred_check
          %p230 = pneg %p115
        $region26: #{forward.1} parent=11 // pred_check_branch
          %232 = sbr.rel (%p230) target = $region28
        $region27: #{forward.1} parent=11 // pred_region
          _
        $region28: #{forward.1} parent=11 // pred_fallthru
          _
        // Predicated region
        $region29: #{forward.1} parent=11 // pred_check
          %p233 = pneg %p136
        $region30: #{forward.1} parent=11 // pred_check_branch
          %235 = sbr.rel (%p233) target = $region32
        $region31: #{forward.1} parent=11 // pred_region
          _
        $region32: #{forward.1} parent=11 // pred_fallthru
          _
        // Predicated region
        $region33: #{forward.1} parent=11 // pred_check
          %p236 = pneg %p157
        $region34: #{forward.1} parent=11 // pred_check_branch
          %238 = sbr.rel (%p236) target = $region36
        $region35: #{forward.1} parent=11 // pred_region
          _
        $region36: #{forward.1} parent=11 // pred_fallthru
          _
      $region12: #{forward.1} parent=5 // pred_fallthru
        _
      %p239 = scmp.lt.s32.totalorder %s14, 2
      // Predicated region
      $region37: #{forward.1} parent=5 // pred_check
        %p240 = pneg %p239
      $region38: #{forward.1} parent=5 // pred_check_branch
        %242 = sbr.rel (%p240) target = $region40
      $region39: #{forward.1} parent=5 // pred_region
        _
      $region40: #{forward.1} parent=5 // pred_fallthru
        _
      %p243 = scmp.le.s32.totalorder 1, %s14
      %p244 = scmp.lt.s32.totalorder %s14, 3
      %p245 = pnand %p243, %p244
      %p246 = pneg %p245
      // Predicated region
      $region41: #{forward.1} parent=5 // pred_check
        _
      $region42: #{forward.1} parent=5 // pred_check_branch
        %248 = sbr.rel (%p245) target = $region44
      $region43: #{forward.1} parent=5 // pred_region
        %s249 = ssub.s32 %s14, 1
        // Predicated region
        $region45: #{forward.1} parent=43 // pred_check
          %p250 = pneg %p73
        $region46: #{forward.1} parent=43 // pred_check_branch
          %252 = sbr.rel (%p250) target = $region48
        $region47: #{forward.1} parent=43 // pred_region
          %253 = dma.done [#allocation6], 1024
        $region48: #{forward.1} parent=43 // pred_fallthru
          _
        // Predicated region
        $region49: #{forward.1} parent=43 // pred_check
          %p254 = pneg %p94
        $region50: #{forward.1} parent=43 // pred_check_branch
          %256 = sbr.rel (%p254) target = $region52
        $region51: #{forward.1} parent=43 // pred_region
          %257 = dma.done [#allocation8], 1024
        $region52: #{forward.1} parent=43 // pred_fallthru
          _
        %p258 = pneg %p47
        %p259 = pneg %p44
        %p260 = pneg %p73
        %p261 = pneg %p70
        %p262 = pneg %p94
        %p263 = pneg %p91
        %p264 = pneg %p115
        %p265 = pneg %p112
        %p266 = pneg %p136
        %p267 = pneg %p133
        %p268 = pneg %p157
        %p269 = pneg %p154
        %p270 = pneg %p183
        %p271 = pneg %p180
        %s272 = smul.u32 16, %s24
        %p273 = scmp.lt.s32.totalorder %s272, 15
        %s274 = scalar_select %p273, %s272, 15
        %s275 = smul.addr %s274, 8
        %s276 = scalar_lea.vmem %s6, %s275
        %s277 = smul.u32 16, %s24
        %s278 = smul.u32 16, %s24
        %p279 = scmp.lt.s32.totalorder %s278, 15
        %s280 = scalar_select %p279, %s278, 15
        %s281 = smul.addr %s280, 8
        %s282 = scalar_lea.vmem %s6, %s281
        %s283 = smul.u32 16, %s24
        %s285 = smul.u32 %s24, 128
        %p286 = scmp.eq.s32.totalorder %s23, 0
        %p287 = scmp.eq.s32.totalorder %s24, 0
        %p288 = pnand %p286, %p287
        %p289 = pneg %p288
        // Predicated region
        $region53: #{forward.1} parent=43 // pred_check
          _
        $region54: #{forward.1} parent=43 // pred_check_branch
          %291 = sbr.rel (%p288) target = $region56
        $region55: #{forward.1} parent=43 // pred_region
          %v292 = vld [vmem:[%s0] sm:$0xf]
          %v293 = vld [vmem:[%s0 + $0x4] sm:$0xf]
          %v294 = vld [vmem:[%s0 + $0x8] sm:$0xf]
          %v295 = vld [vmem:[%s0 + $0xc] sm:$0xf]
          %v296 = vld [vmem:[%s0 + $0x10] sm:$0xf]
          %v297 = vld [vmem:[%s0 + $0x14] sm:$0xf]
          %v298 = vld [vmem:[%s0 + $0x18] sm:$0xf]
          %v299 = vld [vmem:[%s0 + $0x1c] sm:$0xf]
          %v300 = vld [vmem:[%s0 + $0x20] sm:$0xf]
          %v301 = vld [vmem:[%s0 + $0x24] sm:$0xf]
          %v302 = vld [vmem:[%s0 + $0x28] sm:$0xf]
          %v303 = vld [vmem:[%s0 + $0x2c] sm:$0xf]
          %v304 = vld [vmem:[%s0 + $0x30] sm:$0xf]
          %v305 = vld [vmem:[%s0 + $0x34] sm:$0xf]
          %v306 = vld [vmem:[%s0 + $0x38] sm:$0xf]
          %v307 = vld [vmem:[%s0 + $0x3c] sm:$0xf]
          %v308 = vld [vmem:[#allocation7] sm:$0xf]
          %v309 = vld [vmem:[#allocation7 + $0x4] sm:$0xf]
          %v310 = vld [vmem:[#allocation7 + $0x8] sm:$0xf]
          %v311 = vld [vmem:[#allocation7 + $0xc] sm:$0xf]
          %v312 = vld [vmem:[#allocation7 + $0x10] sm:$0xf]
          %v313 = vld [vmem:[#allocation7 + $0x14] sm:$0xf]
          %v314 = vld [vmem:[#allocation7 + $0x18] sm:$0xf]
          %v315 = vld [vmem:[#allocation7 + $0x1c] sm:$0xf]
          %v316 = vld [vmem:[#allocation7 + $0x20] sm:$0xf]
          %v317 = vld [vmem:[#allocation7 + $0x24] sm:$0xf]
          %v318 = vld [vmem:[#allocation7 + $0x28] sm:$0xf]
          %v319 = vld [vmem:[#allocation7 + $0x2c] sm:$0xf]
          %v320 = vld [vmem:[#allocation7 + $0x30] sm:$0xf]
          %v321 = vld [vmem:[#allocation7 + $0x34] sm:$0xf]
          %v322 = vld [vmem:[#allocation7 + $0x38] sm:$0xf]
          %v323 = vld [vmem:[#allocation7 + $0x3c] sm:$0xf]
          %v340 = vunpack.c.l.b16 %v292
          %v341 = vunpack.c.l.b16 %v293
          %v342 = vunpack.c.l.b16 %v294
          %v343 = vunpack.c.l.b16 %v295
          %v344 = vunpack.c.l.b16 %v296
          %v345 = vunpack.c.l.b16 %v297
          %v346 = vunpack.c.l.b16 %v298
          %v347 = vunpack.c.l.b16 %v299
          %v348 = vunpack.c.l.b16 %v300
          %v349 = vunpack.c.l.b16 %v301
          %v350 = vunpack.c.l.b16 %v302
          %v351 = vunpack.c.l.b16 %v303
          %v352 = vunpack.c.l.b16 %v304
          %v353 = vunpack.c.l.b16 %v305
          %v354 = vunpack.c.l.b16 %v306
          %v355 = vunpack.c.l.b16 %v307
          %v356 = vpack.c.b16 %v341, %v340
          %v357 = vpack.c.b16 %v343, %v342
          %v358 = vpack.c.b16 %v345, %v344
          %v359 = vpack.c.b16 %v347, %v346
          %v360 = vpack.c.b16 %v349, %v348
          %v361 = vpack.c.b16 %v351, %v350
          %v362 = vpack.c.b16 %v353, %v352
          %v363 = vpack.c.b16 %v355, %v354
          %v388 = vunpack.c.l.b16 %v308
          %v389 = vunpack.c.l.b16 %v309
          %v390 = vunpack.c.l.b16 %v310
          %v391 = vunpack.c.l.b16 %v311
          %v392 = vunpack.c.l.b16 %v312
          %v393 = vunpack.c.l.b16 %v313
          %v394 = vunpack.c.l.b16 %v314
          %v395 = vunpack.c.l.b16 %v315
          %v396 = vunpack.c.l.b16 %v316
          %v397 = vunpack.c.l.b16 %v317
          %v398 = vunpack.c.l.b16 %v318
          %v399 = vunpack.c.l.b16 %v319
          %v400 = vunpack.c.l.b16 %v320
          %v401 = vunpack.c.l.b16 %v321
          %v402 = vunpack.c.l.b16 %v322
          %v403 = vunpack.c.l.b16 %v323
          %v404 = vpack.c.b16 %v389, %v388
          %v405 = vpack.c.b16 %v391, %v390
          %v406 = vpack.c.b16 %v393, %v392
          %v407 = vpack.c.b16 %v395, %v394
          %v408 = vpack.c.b16 %v397, %v396
          %v409 = vpack.c.b16 %v399, %v398
          %v410 = vpack.c.b16 %v401, %v400
          %v411 = vpack.c.b16 %v403, %v402
          %420 = vmatprep.subr.bf16.mxu0 0
          %421 = vmatpush1.bf16.msra.mxu0 %v411
          %422 = vmatprep.subr.bf16.mxu0 0
          %423 = vmatpush1.bf16.msra.mxu0 %v410
          %424 = vmatprep.subr.bf16.mxu0 0
          %425 = vmatpush1.bf16.msra.mxu0 %v409
          %426 = vmatprep.subr.bf16.mxu0 0
          %427 = vmatpush1.bf16.msra.mxu0 %v408
          %428 = vmatprep.subr.bf16.mxu0 0
          %429 = vmatpush1.bf16.msra.mxu0 %v407
          %430 = vmatprep.subr.bf16.mxu0 0
          %431 = vmatpush1.bf16.msra.mxu0 %v406
          %432 = vmatprep.subr.bf16.mxu0 0
          %433 = vmatpush1.bf16.msra.mxu0 %v405
          %434 = vmatprep.subr.bf16.mxu0 0
          %435 = vmatpush1.bf16.msra.mxu0 %v404
          %436 = vmatprep.subr.bf16.mxu0 0
          %437 = vmatpush2.bf16.msra.mxu0 0
          %438 = vmatprep.subr.bf16.mxu0 0
          %439 = vmatpush2.bf16.msra.mxu0 0
          %440 = vmatprep.subr.bf16.mxu0 0
          %441 = vmatpush2.bf16.msra.mxu0 0
          %442 = vmatprep.subr.bf16.mxu0 0
          %443 = vmatpush2.bf16.msra.mxu0 0
          %444 = vmatprep.subr.bf16.mxu0 0
          %445 = vmatpush2.bf16.msra.mxu0 0
          %446 = vmatprep.subr.bf16.mxu0 0
          %447 = vmatpush2.bf16.msra.mxu0 0
          %448 = vmatprep.subr.bf16.mxu0 0
          %449 = vmatpush2.bf16.msra.mxu0 0
          %450 = vmatprep.subr.bf16.mxu0 0
          %451 = vmatpush2.bf16.msra.mxu0 0
          %452 = vmatprep.mubr.bf16.mxu0 0
          %453 = vmatmul.mubr.bf16.gmra.mxu0 %v356
          %v454 = vpop.f32.mrf.mxu0
          %v455 = vadd.f32 0.0, %v454
          %v456 = vpop.f32.mrf.mxu0
          %v457 = vpop.f32.mrf.mxu0
          %v458 = vadd.f32 0.0, %v457
          %v459 = vpop.f32.mrf.mxu0
          %460 = vmatprep.mubr.bf16.mxu0 0
          %461 = vmatmul.mubr.bf16.gmra.mxu0 %v357
          %v462 = vpop.f32.mrf.mxu0
          %v463 = vadd.f32 0.0, %v462
          %v464 = vpop.f32.mrf.mxu0
          %v465 = vpop.f32.mrf.mxu0
          %v466 = vadd.f32 0.0, %v465
          %v467 = vpop.f32.mrf.mxu0
          %468 = vmatprep.mubr.bf16.mxu0 0
          %469 = vmatmul.mubr.bf16.gmra.mxu0 %v358
          %v470 = vpop.f32.mrf.mxu0
          %v471 = vadd.f32 0.0, %v470
          %v472 = vpop.f32.mrf.mxu0
          %v473 = vpop.f32.mrf.mxu0
          %v474 = vadd.f32 0.0, %v473
          %v475 = vpop.f32.mrf.mxu0
          %476 = vmatprep.mubr.bf16.mxu0 0
          %477 = vmatmul.mubr.bf16.gmra.mxu0 %v359
          %v478 = vpop.f32.mrf.mxu0
          %v479 = vadd.f32 0.0, %v478
          %v480 = vpop.f32.mrf.mxu0
          %v481 = vpop.f32.mrf.mxu0
          %v482 = vadd.f32 0.0, %v481
          %v483 = vpop.f32.mrf.mxu0
          %484 = vmatprep.mubr.bf16.mxu0 0
          %485 = vmatmul.mubr.bf16.gmra.mxu0 %v360
          %v486 = vpop.f32.mrf.mxu0
          %v487 = vadd.f32 0.0, %v486
          %v488 = vpop.f32.mrf.mxu0
          %v489 = vpop.f32.mrf.mxu0
          %v490 = vadd.f32 0.0, %v489
          %v491 = vpop.f32.mrf.mxu0
          %492 = vmatprep.mubr.bf16.mxu0 0
          %493 = vmatmul.mubr.bf16.gmra.mxu0 %v361
          %v494 = vpop.f32.mrf.mxu0
          %v495 = vadd.f32 0.0, %v494
          %v496 = vpop.f32.mrf.mxu0
          %v497 = vpop.f32.mrf.mxu0
          %v498 = vadd.f32 0.0, %v497
          %v499 = vpop.f32.mrf.mxu0
          %500 = vmatprep.mubr.bf16.mxu0 0
          %501 = vmatmul.mubr.bf16.gmra.mxu0 %v362
          %v502 = vpop.f32.mrf.mxu0
          %v503 = vadd.f32 0.0, %v502
          %v504 = vpop.f32.mrf.mxu0
          %v505 = vpop.f32.mrf.mxu0
          %v506 = vadd.f32 0.0, %v505
          %v507 = vpop.f32.mrf.mxu0
          %508 = vmatprep.mubr.bf16.mxu0 0
          %509 = vmatmul.mubr.bf16.gmra.mxu0 %v363
          %v510 = vpop.f32.mrf.mxu0
          %v511 = vadd.f32 0.0, %v510
          %v512 = vpop.f32.mrf.mxu0
          %v513 = vpop.f32.mrf.mxu0
          %v514 = vadd.f32 0.0, %v513
          %v515 = vpop.f32.mrf.mxu0
          %516 = vdwg.mxu0
          %v517 = vpack.c.bf16 %v458, %v455
          %v518 = vpack.c.bf16 %v466, %v463
          %v519 = vpack.c.bf16 %v474, %v471
          %v520 = vpack.c.bf16 %v482, %v479
          %v521 = vpack.c.bf16 %v490, %v487
          %v522 = vpack.c.bf16 %v498, %v495
          %v523 = vpack.c.bf16 %v506, %v503
          %v524 = vpack.c.bf16 %v514, %v511
          %v533 = vunpack.c.l.b16 %v517
          %v534 = vunpack.c.h.b16 %v517
          %v535 = vunpack.c.l.b16 %v518
          %v536 = vunpack.c.h.b16 %v518
          %v537 = vunpack.c.l.b16 %v519
          %v538 = vunpack.c.h.b16 %v519
          %v539 = vunpack.c.l.b16 %v520
          %v540 = vunpack.c.h.b16 %v520
          %v541 = vunpack.c.l.b16 %v521
          %v542 = vunpack.c.h.b16 %v521
          %v543 = vunpack.c.l.b16 %v522
          %v544 = vunpack.c.h.b16 %v522
          %v545 = vunpack.c.l.b16 %v523
          %v546 = vunpack.c.h.b16 %v523
          %v547 = vunpack.c.l.b16 %v524
          %v548 = vunpack.c.h.b16 %v524
          %v549 = vpack.c.b16 %v533, %v533
          %v550 = vpack.c.b16 %v534, %v534
          %v551 = vpack.c.b16 %v535, %v535
          %v552 = vpack.c.b16 %v536, %v536
          %v553 = vpack.c.b16 %v537, %v537
          %v554 = vpack.c.b16 %v538, %v538
          %v555 = vpack.c.b16 %v539, %v539
          %v556 = vpack.c.b16 %v540, %v540
          %v557 = vpack.c.b16 %v541, %v541
          %v558 = vpack.c.b16 %v542, %v542
          %v559 = vpack.c.b16 %v543, %v543
          %v560 = vpack.c.b16 %v544, %v544
          %v561 = vpack.c.b16 %v545, %v545
          %v562 = vpack.c.b16 %v546, %v546
          %v563 = vpack.c.b16 %v547, %v547
          %v564 = vpack.c.b16 %v548, %v548
          %581 = vst [vmem:[#allocation2] sm:$0xf] %v549
          %582 = vst [vmem:[#allocation2 + $0x4] sm:$0xf] %v550
          %583 = vst [vmem:[#allocation2 + $0x8] sm:$0xf] %v551
          %584 = vst [vmem:[#allocation2 + $0xc] sm:$0xf] %v552
          %585 = vst [vmem:[#allocation2 + $0x10] sm:$0xf] %v553
          %586 = vst [vmem:[#allocation2 + $0x14] sm:$0xf] %v554
          %587 = vst [vmem:[#allocation2 + $0x18] sm:$0xf] %v555
          %588 = vst [vmem:[#allocation2 + $0x1c] sm:$0xf] %v556
          %589 = vst [vmem:[#allocation2 + $0x20] sm:$0xf] %v557
          %590 = vst [vmem:[#allocation2 + $0x24] sm:$0xf] %v558
          %591 = vst [vmem:[#allocation2 + $0x28] sm:$0xf] %v559
          %592 = vst [vmem:[#allocation2 + $0x2c] sm:$0xf] %v560
          %593 = vst [vmem:[#allocation2 + $0x30] sm:$0xf] %v561
          %594 = vst [vmem:[#allocation2 + $0x34] sm:$0xf] %v562
          %595 = vst [vmem:[#allocation2 + $0x38] sm:$0xf] %v563
          %596 = vst [vmem:[#allocation2 + $0x3c] sm:$0xf] %v564
        $region56: #{forward.1} parent=43 // pred_fallthru
          _
        // Predicated region
        $region57: #{forward.1} parent=43 // pred_check
          %p597 = pneg %p286
        $region58: #{forward.1} parent=43 // pred_check_branch
          %599 = sbr.rel (%p597) target = $region60
        $region59: #{forward.1} parent=43 // pred_region
          %v600 = vld [vmem:[#allocation5] sm:$0xf]
          %v601 = vld [vmem:[#allocation5 + $0x4] sm:$0xf]
          %v602 = vld [vmem:[#allocation5 + $0x8] sm:$0xf]
          %v603 = vld [vmem:[#allocation5 + $0xc] sm:$0xf]
          %v604 = vld [vmem:[#allocation5 + $0x10] sm:$0xf]
          %v605 = vld [vmem:[#allocation5 + $0x14] sm:$0xf]
          %v606 = vld [vmem:[#allocation5 + $0x18] sm:$0xf]
          %v607 = vld [vmem:[#allocation5 + $0x1c] sm:$0xf]
          %v608 = vld [vmem:[#allocation5 + $0x20] sm:$0xf]
          %v609 = vld [vmem:[#allocation5 + $0x24] sm:$0xf]
          %v610 = vld [vmem:[#allocation5 + $0x28] sm:$0xf]
          %v611 = vld [vmem:[#allocation5 + $0x2c] sm:$0xf]
          %v612 = vld [vmem:[#allocation5 + $0x30] sm:$0xf]
          %v613 = vld [vmem:[#allocation5 + $0x34] sm:$0xf]
          %v614 = vld [vmem:[#allocation5 + $0x38] sm:$0xf]
          %v615 = vld [vmem:[#allocation5 + $0x3c] sm:$0xf]
          %v616 = vld [vmem:[#allocation2] sm:$0xf]
          %v617 = vld [vmem:[#allocation2 + $0x4] sm:$0xf]
          %v618 = vld [vmem:[#allocation2 + $0x8] sm:$0xf]
          %v619 = vld [vmem:[#allocation2 + $0xc] sm:$0xf]
          %v620 = vld [vmem:[#allocation2 + $0x10] sm:$0xf]
          %v621 = vld [vmem:[#allocation2 + $0x14] sm:$0xf]
          %v622 = vld [vmem:[#allocation2 + $0x18] sm:$0xf]
          %v623 = vld [vmem:[#allocation2 + $0x1c] sm:$0xf]
          %v624 = vld [vmem:[#allocation2 + $0x20] sm:$0xf]
          %v625 = vld [vmem:[#allocation2 + $0x24] sm:$0xf]
          %v626 = vld [vmem:[#allocation2 + $0x28] sm:$0xf]
          %v627 = vld [vmem:[#allocation2 + $0x2c] sm:$0xf]
          %v628 = vld [vmem:[#allocation2 + $0x30] sm:$0xf]
          %v629 = vld [vmem:[#allocation2 + $0x34] sm:$0xf]
          %v630 = vld [vmem:[#allocation2 + $0x38] sm:$0xf]
          %v631 = vld [vmem:[#allocation2 + $0x3c] sm:$0xf]
          %v632 = vld [vmem:[%s3] sm:$0x1]
          %v634 = vlaneseq
          %v635 = vshrl.u32 %v634, 7
          %v636 = vsub.s32 0, %v635
          %v637 = vrot.slane %v632, %v636
          %v655 = vunpack.c.l.b16 %v600
          %v656 = vunpack.c.l.b16 %v601
          %v657 = vunpack.c.l.b16 %v602
          %v658 = vunpack.c.l.b16 %v603
          %v659 = vunpack.c.l.b16 %v604
          %v660 = vunpack.c.l.b16 %v605
          %v661 = vunpack.c.l.b16 %v606
          %v662 = vunpack.c.l.b16 %v607
          %v663 = vunpack.c.l.b16 %v608
          %v664 = vunpack.c.l.b16 %v609
          %v665 = vunpack.c.l.b16 %v610
          %v666 = vunpack.c.l.b16 %v611
          %v667 = vunpack.c.l.b16 %v612
          %v668 = vunpack.c.l.b16 %v613
          %v669 = vunpack.c.l.b16 %v614
          %v670 = vunpack.c.l.b16 %v615
          %v671 = vpack.c.b16 %v656, %v655
          %v672 = vpack.c.b16 %v658, %v657
          %v673 = vpack.c.b16 %v660, %v659
          %v674 = vpack.c.b16 %v662, %v661
          %v675 = vpack.c.b16 %v664, %v663
          %v676 = vpack.c.b16 %v666, %v665
          %v677 = vpack.c.b16 %v668, %v667
          %v678 = vpack.c.b16 %v670, %v669
          %v703 = vunpack.c.l.b16 %v616
          %v704 = vunpack.c.l.b16 %v617
          %v705 = vunpack.c.l.b16 %v618
          %v706 = vunpack.c.l.b16 %v619
          %v707 = vunpack.c.l.b16 %v620
          %v708 = vunpack.c.l.b16 %v621
          %v709 = vunpack.c.l.b16 %v622
          %v710 = vunpack.c.l.b16 %v623
          %v711 = vunpack.c.l.b16 %v624
          %v712 = vunpack.c.l.b16 %v625
          %v713 = vunpack.c.l.b16 %v626
          %v714 = vunpack.c.l.b16 %v627
          %v715 = vunpack.c.l.b16 %v628
          %v716 = vunpack.c.l.b16 %v629
          %v717 = vunpack.c.l.b16 %v630
          %v718 = vunpack.c.l.b16 %v631
          %v719 = vpack.c.b16 %v704, %v703
          %v720 = vpack.c.b16 %v706, %v705
          %v721 = vpack.c.b16 %v708, %v707
          %v722 = vpack.c.b16 %v710, %v709
          %v723 = vpack.c.b16 %v712, %v711
          %v724 = vpack.c.b16 %v714, %v713
          %v725 = vpack.c.b16 %v716, %v715
          %v726 = vpack.c.b16 %v718, %v717
          %735 = vmatprep.subr.bf16.mxu0 0
          %736 = vmatpush1.bf16.msra.mxu0 %v726
          %737 = vmatprep.subr.bf16.mxu0 0
          %738 = vmatpush1.bf16.msra.mxu0 %v725
          %739 = vmatprep.subr.bf16.mxu0 0
          %740 = vmatpush1.bf16.msra.mxu0 %v724
          %741 = vmatprep.subr.bf16.mxu0 0
          %742 = vmatpush1.bf16.msra.mxu0 %v723
          %743 = vmatprep.subr.bf16.mxu0 0
          %744 = vmatpush1.bf16.msra.mxu0 %v722
          %745 = vmatprep.subr.bf16.mxu0 0
          %746 = vmatpush1.bf16.msra.mxu0 %v721
          %747 = vmatprep.subr.bf16.mxu0 0
          %748 = vmatpush1.bf16.msra.mxu0 %v720
          %749 = vmatprep.subr.bf16.mxu0 0
          %750 = vmatpush1.bf16.msra.mxu0 %v719
          %751 = vmatprep.subr.bf16.mxu0 0
          %752 = vmatpush2.bf16.msra.mxu0 0
          %753 = vmatprep.subr.bf16.mxu0 0
          %754 = vmatpush2.bf16.msra.mxu0 0
          %755 = vmatprep.subr.bf16.mxu0 0
          %756 = vmatpush2.bf16.msra.mxu0 0
          %757 = vmatprep.subr.bf16.mxu0 0
          %758 = vmatpush2.bf16.msra.mxu0 0
          %759 = vmatprep.subr.bf16.mxu0 0
          %760 = vmatpush2.bf16.msra.mxu0 0
          %761 = vmatprep.subr.bf16.mxu0 0
          %762 = vmatpush2.bf16.msra.mxu0 0
          %763 = vmatprep.subr.bf16.mxu0 0
          %764 = vmatpush2.bf16.msra.mxu0 0
          %765 = vmatprep.subr.bf16.mxu0 0
          %766 = vmatpush2.bf16.msra.mxu0 0
          %767 = vmatprep.mubr.bf16.mxu0 0
          %768 = vmatmul.mubr.bf16.gmra.mxu0 %v671
          %v769 = vpop.f32.mrf.mxu0
          %v770 = vadd.f32 %v637, %v769
          %v771 = vpop.f32.mrf.mxu0
          %v772 = vpop.f32.mrf.mxu0
          %v773 = vadd.f32 %v637, %v772
          %v774 = vpop.f32.mrf.mxu0
          %775 = vmatprep.mubr.bf16.mxu0 0
          %776 = vmatmul.mubr.bf16.gmra.mxu0 %v672
          %v777 = vpop.f32.mrf.mxu0
          %v778 = vadd.f32 %v637, %v777
          %v779 = vpop.f32.mrf.mxu0
          %v780 = vpop.f32.mrf.mxu0
          %v781 = vadd.f32 %v637, %v780
          %v782 = vpop.f32.mrf.mxu0
          %783 = vmatprep.mubr.bf16.mxu0 0
          %784 = vmatmul.mubr.bf16.gmra.mxu0 %v673
          %v785 = vpop.f32.mrf.mxu0
          %v786 = vadd.f32 %v637, %v785
          %v787 = vpop.f32.mrf.mxu0
          %v788 = vpop.f32.mrf.mxu0
          %v789 = vadd.f32 %v637, %v788
          %v790 = vpop.f32.mrf.mxu0
          %791 = vmatprep.mubr.bf16.mxu0 0
          %792 = vmatmul.mubr.bf16.gmra.mxu0 %v674
          %v793 = vpop.f32.mrf.mxu0
          %v794 = vadd.f32 %v637, %v793
          %v795 = vpop.f32.mrf.mxu0
          %v796 = vpop.f32.mrf.mxu0
          %v797 = vadd.f32 %v637, %v796
          %v798 = vpop.f32.mrf.mxu0
          %799 = vmatprep.mubr.bf16.mxu0 0
          %800 = vmatmul.mubr.bf16.gmra.mxu0 %v675
          %v801 = vpop.f32.mrf.mxu0
          %v802 = vadd.f32 %v637, %v801
          %v803 = vpop.f32.mrf.mxu0
          %v804 = vpop.f32.mrf.mxu0
          %v805 = vadd.f32 %v637, %v804
          %v806 = vpop.f32.mrf.mxu0
          %807 = vmatprep.mubr.bf16.mxu0 0
          %808 = vmatmul.mubr.bf16.gmra.mxu0 %v676
          %v809 = vpop.f32.mrf.mxu0
          %v810 = vadd.f32 %v637, %v809
          %v811 = vpop.f32.mrf.mxu0
          %v812 = vpop.f32.mrf.mxu0
          %v813 = vadd.f32 %v637, %v812
          %v814 = vpop.f32.mrf.mxu0
          %815 = vmatprep.mubr.bf16.mxu0 0
          %816 = vmatmul.mubr.bf16.gmra.mxu0 %v677
          %v817 = vpop.f32.mrf.mxu0
          %v818 = vadd.f32 %v637, %v817
          %v819 = vpop.f32.mrf.mxu0
          %v820 = vpop.f32.mrf.mxu0
          %v821 = vadd.f32 %v637, %v820
          %v822 = vpop.f32.mrf.mxu0
          %823 = vmatprep.mubr.bf16.mxu0 0
          %824 = vmatmul.mubr.bf16.gmra.mxu0 %v678
          %v825 = vpop.f32.mrf.mxu0
          %v826 = vadd.f32 %v637, %v825
          %v827 = vpop.f32.mrf.mxu0
          %v828 = vpop.f32.mrf.mxu0
          %v829 = vadd.f32 %v637, %v828
          %v830 = vpop.f32.mrf.mxu0
          %831 = vdwg.mxu0
          %v832 = vmax.f32 %v770, 0.0
          %v833 = vmax.f32 %v773, 0.0
          %v834 = vmax.f32 %v778, 0.0
          %v835 = vmax.f32 %v781, 0.0
          %v836 = vmax.f32 %v786, 0.0
          %v837 = vmax.f32 %v789, 0.0
          %v838 = vmax.f32 %v794, 0.0
          %v839 = vmax.f32 %v797, 0.0
          %v840 = vmax.f32 %v802, 0.0
          %v841 = vmax.f32 %v805, 0.0
          %v842 = vmax.f32 %v810, 0.0
          %v843 = vmax.f32 %v813, 0.0
          %v844 = vmax.f32 %v818, 0.0
          %v845 = vmax.f32 %v821, 0.0
          %v846 = vmax.f32 %v826, 0.0
          %v847 = vmax.f32 %v829, 0.0
          %v848 = vpack.c.bf16 %v833, %v832
          %v849 = vpack.c.bf16 %v835, %v834
          %v850 = vpack.c.bf16 %v837, %v836
          %v851 = vpack.c.bf16 %v839, %v838
          %v852 = vpack.c.bf16 %v841, %v840
          %v853 = vpack.c.bf16 %v843, %v842
          %v854 = vpack.c.bf16 %v845, %v844
          %v855 = vpack.c.bf16 %v847, %v846
          %v864 = vunpack.c.l.b16 %v848
          %v865 = vunpack.c.h.b16 %v848
          %v866 = vunpack.c.l.b16 %v849
          %v867 = vunpack.c.h.b16 %v849
          %v868 = vunpack.c.l.b16 %v850
          %v869 = vunpack.c.h.b16 %v850
          %v870 = vunpack.c.l.b16 %v851
          %v871 = vunpack.c.h.b16 %v851
          %v872 = vunpack.c.l.b16 %v852
          %v873 = vunpack.c.h.b16 %v852
          %v874 = vunpack.c.l.b16 %v853
          %v875 = vunpack.c.h.b16 %v853
          %v876 = vunpack.c.l.b16 %v854
          %v877 = vunpack.c.h.b16 %v854
          %v878 = vunpack.c.l.b16 %v855
          %v879 = vunpack.c.h.b16 %v855
          %v880 = vpack.c.b16 %v864, %v864
          %v881 = vpack.c.b16 %v865, %v865
          %v882 = vpack.c.b16 %v866, %v866
          %v883 = vpack.c.b16 %v867, %v867
          %v884 = vpack.c.b16 %v868, %v868
          %v885 = vpack.c.b16 %v869, %v869
          %v886 = vpack.c.b16 %v870, %v870
          %v887 = vpack.c.b16 %v871, %v871
          %v888 = vpack.c.b16 %v872, %v872
          %v889 = vpack.c.b16 %v873, %v873
          %v890 = vpack.c.b16 %v874, %v874
          %v891 = vpack.c.b16 %v875, %v875
          %v892 = vpack.c.b16 %v876, %v876
          %v893 = vpack.c.b16 %v877, %v877
          %v894 = vpack.c.b16 %v878, %v878
          %v895 = vpack.c.b16 %v879, %v879
          %s912 = sshra.s32 %s285, 3
          %s913 = sand.u32 %s285, 7
          %s914 = smul.addr %s912, 4
          %s915 = scalar_lea.vmem [#allocation3], %s914
          %916 = vst [vmem:[%s915] sm:$0xf] %v880
          %917 = vst [vmem:[%s915 + $0x4] sm:$0xf] %v881
          %918 = vst [vmem:[%s915 + $0x8] sm:$0xf] %v882
          %919 = vst [vmem:[%s915 + $0xc] sm:$0xf] %v883
          %920 = vst [vmem:[%s915 + $0x10] sm:$0xf] %v884
          %921 = vst [vmem:[%s915 + $0x14] sm:$0xf] %v885
          %922 = vst [vmem:[%s915 + $0x18] sm:$0xf] %v886
          %923 = vst [vmem:[%s915 + $0x1c] sm:$0xf] %v887
          %924 = vst [vmem:[%s915 + $0x20] sm:$0xf] %v888
          %925 = vst [vmem:[%s915 + $0x24] sm:$0xf] %v889
          %926 = vst [vmem:[%s915 + $0x28] sm:$0xf] %v890
          %927 = vst [vmem:[%s915 + $0x2c] sm:$0xf] %v891
          %928 = vst [vmem:[%s915 + $0x30] sm:$0xf] %v892
          %929 = vst [vmem:[%s915 + $0x34] sm:$0xf] %v893
          %930 = vst [vmem:[%s915 + $0x38] sm:$0xf] %v894
          %931 = vst [vmem:[%s915 + $0x3c] sm:$0xf] %v895
          %932 = vst [vmem:[%s282] sm:$0xff] 0.0
          %933 = vst [vmem:[%s282 + $0x8] sm:$0xff] 0.0
          %934 = vst [vmem:[%s282 + $0x10] sm:$0xff] 0.0
          %935 = vst [vmem:[%s282 + $0x18] sm:$0xff] 0.0
          %936 = vst [vmem:[%s282 + $0x20] sm:$0xff] 0.0
          %937 = vst [vmem:[%s282 + $0x28] sm:$0xff] 0.0
          %938 = vst [vmem:[%s282 + $0x30] sm:$0xff] 0.0
          %939 = vst [vmem:[%s282 + $0x38] sm:$0xff] 0.0
          %940 = vst [vmem:[%s282 + $0x40] sm:$0xff] 0.0
          %941 = vst [vmem:[%s282 + $0x48] sm:$0xff] 0.0
          %942 = vst [vmem:[%s282 + $0x50] sm:$0xff] 0.0
          %943 = vst [vmem:[%s282 + $0x58] sm:$0xff] 0.0
          %944 = vst [vmem:[%s282 + $0x60] sm:$0xff] 0.0
          %945 = vst [vmem:[%s282 + $0x68] sm:$0xff] 0.0
          %946 = vst [vmem:[%s282 + $0x70] sm:$0xff] 0.0
          %947 = vst [vmem:[%s282 + $0x78] sm:$0xff] 0.0
        $region60: #{forward.1} parent=43 // pred_fallthru
          _
        %p948 = scmp.eq.s32.totalorder %s23, 1
        %p949 = pnand %p948, %p287
        %p950 = pneg %p949
        // Predicated region
        $region61: #{forward.1} parent=43 // pred_check
          _
        $region62: #{forward.1} parent=43 // pred_check_branch
          %952 = sbr.rel (%p949) target = $region64
        $region63: #{forward.1} parent=43 // pred_region
          %v953 = vld [vmem:[#allocation3] sm:$0xf]
          %v954 = vld [vmem:[#allocation3 + $0x4] sm:$0xf]
          %v955 = vld [vmem:[#allocation3 + $0x8] sm:$0xf]
          %v956 = vld [vmem:[#allocation3 + $0xc] sm:$0xf]
          %v957 = vld [vmem:[#allocation3 + $0x10] sm:$0xf]
          %v958 = vld [vmem:[#allocation3 + $0x14] sm:$0xf]
          %v959 = vld [vmem:[#allocation3 + $0x18] sm:$0xf]
          %v960 = vld [vmem:[#allocation3 + $0x1c] sm:$0xf]
          %v961 = vld [vmem:[#allocation3 + $0x20] sm:$0xf]
          %v962 = vld [vmem:[#allocation3 + $0x24] sm:$0xf]
          %v963 = vld [vmem:[#allocation3 + $0x28] sm:$0xf]
          %v964 = vld [vmem:[#allocation3 + $0x2c] sm:$0xf]
          %v965 = vld [vmem:[#allocation3 + $0x30] sm:$0xf]
          %v966 = vld [vmem:[#allocation3 + $0x34] sm:$0xf]
          %v967 = vld [vmem:[#allocation3 + $0x38] sm:$0xf]
          %v968 = vld [vmem:[#allocation3 + $0x3c] sm:$0xf]
          %v969 = vld [vmem:[%s4] sm:$0xf]
          %v970 = vld [vmem:[%s4 + $0x4] sm:$0xf]
          %v971 = vld [vmem:[%s4 + $0x8] sm:$0xf]
          %v972 = vld [vmem:[%s4 + $0xc] sm:$0xf]
          %v973 = vld [vmem:[%s4 + $0x10] sm:$0xf]
          %v974 = vld [vmem:[%s4 + $0x14] sm:$0xf]
          %v975 = vld [vmem:[%s4 + $0x18] sm:$0xf]
          %v976 = vld [vmem:[%s4 + $0x1c] sm:$0xf]
          %v977 = vld [vmem:[%s4 + $0x20] sm:$0xf]
          %v978 = vld [vmem:[%s4 + $0x24] sm:$0xf]
          %v979 = vld [vmem:[%s4 + $0x28] sm:$0xf]
          %v980 = vld [vmem:[%s4 + $0x2c] sm:$0xf]
          %v981 = vld [vmem:[%s4 + $0x30] sm:$0xf]
          %v982 = vld [vmem:[%s4 + $0x34] sm:$0xf]
          %v983 = vld [vmem:[%s4 + $0x38] sm:$0xf]
          %v984 = vld [vmem:[%s4 + $0x3c] sm:$0xf]
          %v1001 = vunpack.c.l.b16 %v953
          %v1002 = vunpack.c.l.b16 %v954
          %v1003 = vunpack.c.l.b16 %v955
          %v1004 = vunpack.c.l.b16 %v956
          %v1005 = vunpack.c.l.b16 %v957
          %v1006 = vunpack.c.l.b16 %v958
          %v1007 = vunpack.c.l.b16 %v959
          %v1008 = vunpack.c.l.b16 %v960
          %v1009 = vunpack.c.l.b16 %v961
          %v1010 = vunpack.c.l.b16 %v962
          %v1011 = vunpack.c.l.b16 %v963
          %v1012 = vunpack.c.l.b16 %v964
          %v1013 = vunpack.c.l.b16 %v965
          %v1014 = vunpack.c.l.b16 %v966
          %v1015 = vunpack.c.l.b16 %v967
          %v1016 = vunpack.c.l.b16 %v968
          %v1017 = vpack.c.b16 %v1002, %v1001
          %v1018 = vpack.c.b16 %v1004, %v1003
          %v1019 = vpack.c.b16 %v1006, %v1005
          %v1020 = vpack.c.b16 %v1008, %v1007
          %v1021 = vpack.c.b16 %v1010, %v1009
          %v1022 = vpack.c.b16 %v1012, %v1011
          %v1023 = vpack.c.b16 %v1014, %v1013
          %v1024 = vpack.c.b16 %v1016, %v1015
          %v1049 = vunpack.c.l.b16 %v969
          %v1050 = vunpack.c.l.b16 %v970
          %v1051 = vunpack.c.l.b16 %v971
          %v1052 = vunpack.c.l.b16 %v972
          %v1053 = vunpack.c.l.b16 %v973
          %v1054 = vunpack.c.l.b16 %v974
          %v1055 = vunpack.c.l.b16 %v975
          %v1056 = vunpack.c.l.b16 %v976
          %v1057 = vunpack.c.l.b16 %v977
          %v1058 = vunpack.c.l.b16 %v978
          %v1059 = vunpack.c.l.b16 %v979
          %v1060 = vunpack.c.l.b16 %v980
          %v1061 = vunpack.c.l.b16 %v981
          %v1062 = vunpack.c.l.b16 %v982
          %v1063 = vunpack.c.l.b16 %v983
          %v1064 = vunpack.c.l.b16 %v984
          %v1065 = vpack.c.b16 %v1050, %v1049
          %v1066 = vpack.c.b16 %v1052, %v1051
          %v1067 = vpack.c.b16 %v1054, %v1053
          %v1068 = vpack.c.b16 %v1056, %v1055
          %v1069 = vpack.c.b16 %v1058, %v1057
          %v1070 = vpack.c.b16 %v1060, %v1059
          %v1071 = vpack.c.b16 %v1062, %v1061
          %v1072 = vpack.c.b16 %v1064, %v1063
          %1081 = vmatprep.subr.bf16.mxu0 0
          %1082 = vmatpush1.bf16.msra.mxu0 %v1072
          %1083 = vmatprep.subr.bf16.mxu0 0
          %1084 = vmatpush1.bf16.msra.mxu0 %v1071
          %1085 = vmatprep.subr.bf16.mxu0 0
          %1086 = vmatpush1.bf16.msra.mxu0 %v1070
          %1087 = vmatprep.subr.bf16.mxu0 0
          %1088 = vmatpush1.bf16.msra.mxu0 %v1069
          %1089 = vmatprep.subr.bf16.mxu0 0
          %1090 = vmatpush1.bf16.msra.mxu0 %v1068
          %1091 = vmatprep.subr.bf16.mxu0 0
          %1092 = vmatpush1.bf16.msra.mxu0 %v1067
          %1093 = vmatprep.subr.bf16.mxu0 0
          %1094 = vmatpush1.bf16.msra.mxu0 %v1066
          %1095 = vmatprep.subr.bf16.mxu0 0
          %1096 = vmatpush1.bf16.msra.mxu0 %v1065
          %1097 = vmatprep.subr.bf16.mxu0 0
          %1098 = vmatpush2.bf16.msra.mxu0 0
          %1099 = vmatprep.subr.bf16.mxu0 0
          %1100 = vmatpush2.bf16.msra.mxu0 0
          %1101 = vmatprep.subr.bf16.mxu0 0
          %1102 = vmatpush2.bf16.msra.mxu0 0
          %1103 = vmatprep.subr.bf16.mxu0 0
          %1104 = vmatpush2.bf16.msra.mxu0 0
          %1105 = vmatprep.subr.bf16.mxu0 0
          %1106 = vmatpush2.bf16.msra.mxu0 0
          %1107 = vmatprep.subr.bf16.mxu0 0
          %1108 = vmatpush2.bf16.msra.mxu0 0
          %1109 = vmatprep.subr.bf16.mxu0 0
          %1110 = vmatpush2.bf16.msra.mxu0 0
          %1111 = vmatprep.subr.bf16.mxu0 0
          %1112 = vmatpush2.bf16.msra.mxu0 0
          %1113 = vmatprep.mubr.bf16.mxu0 0
          %1114 = vmatmul.mubr.bf16.gmra.mxu0 %v1017
          %v1115 = vpop.f32.mrf.mxu0
          %v1116 = vadd.f32 0.0, %v1115
          %v1117 = vpop.f32.mrf.mxu0
          %v1118 = vpop.f32.mrf.mxu0
          %v1119 = vadd.f32 0.0, %v1118
          %v1120 = vpop.f32.mrf.mxu0
          %1121 = vmatprep.mubr.bf16.mxu0 0
          %1122 = vmatmul.mubr.bf16.gmra.mxu0 %v1018
          %v1123 = vpop.f32.mrf.mxu0
          %v1124 = vadd.f32 0.0, %v1123
          %v1125 = vpop.f32.mrf.mxu0
          %v1126 = vpop.f32.mrf.mxu0
          %v1127 = vadd.f32 0.0, %v1126
          %v1128 = vpop.f32.mrf.mxu0
          %1129 = vmatprep.mubr.bf16.mxu0 0
          %1130 = vmatmul.mubr.bf16.gmra.mxu0 %v1019
          %v1131 = vpop.f32.mrf.mxu0
          %v1132 = vadd.f32 0.0, %v1131
          %v1133 = vpop.f32.mrf.mxu0
          %v1134 = vpop.f32.mrf.mxu0
          %v1135 = vadd.f32 0.0, %v1134
          %v1136 = vpop.f32.mrf.mxu0
          %1137 = vmatprep.mubr.bf16.mxu0 0
          %1138 = vmatmul.mubr.bf16.gmra.mxu0 %v1020
          %v1139 = vpop.f32.mrf.mxu0
          %v1140 = vadd.f32 0.0, %v1139
          %v1141 = vpop.f32.mrf.mxu0
          %v1142 = vpop.f32.mrf.mxu0
          %v1143 = vadd.f32 0.0, %v1142
          %v1144 = vpop.f32.mrf.mxu0
          %1145 = vmatprep.mubr.bf16.mxu0 0
          %1146 = vmatmul.mubr.bf16.gmra.mxu0 %v1021
          %v1147 = vpop.f32.mrf.mxu0
          %v1148 = vadd.f32 0.0, %v1147
          %v1149 = vpop.f32.mrf.mxu0
          %v1150 = vpop.f32.mrf.mxu0
          %v1151 = vadd.f32 0.0, %v1150
          %v1152 = vpop.f32.mrf.mxu0
          %1153 = vmatprep.mubr.bf16.mxu0 0
          %1154 = vmatmul.mubr.bf16.gmra.mxu0 %v1022
          %v1155 = vpop.f32.mrf.mxu0
          %v1156 = vadd.f32 0.0, %v1155
          %v1157 = vpop.f32.mrf.mxu0
          %v1158 = vpop.f32.mrf.mxu0
          %v1159 = vadd.f32 0.0, %v1158
          %v1160 = vpop.f32.mrf.mxu0
          %1161 = vmatprep.mubr.bf16.mxu0 0
          %1162 = vmatmul.mubr.bf16.gmra.mxu0 %v1023
          %v1163 = vpop.f32.mrf.mxu0
          %v1164 = vadd.f32 0.0, %v1163
          %v1165 = vpop.f32.mrf.mxu0
          %v1166 = vpop.f32.mrf.mxu0
          %v1167 = vadd.f32 0.0, %v1166
          %v1168 = vpop.f32.mrf.mxu0
          %1169 = vmatprep.mubr.bf16.mxu0 0
          %1170 = vmatmul.mubr.bf16.gmra.mxu0 %v1024
          %v1171 = vpop.f32.mrf.mxu0
          %v1172 = vadd.f32 0.0, %v1171
          %v1173 = vpop.f32.mrf.mxu0
          %v1174 = vpop.f32.mrf.mxu0
          %v1175 = vadd.f32 0.0, %v1174
          %v1176 = vpop.f32.mrf.mxu0
          %1177 = vdwg.mxu0
          %v1178 = vpack.c.bf16 %v1119, %v1116
          %v1179 = vpack.c.bf16 %v1127, %v1124
          %v1180 = vpack.c.bf16 %v1135, %v1132
          %v1181 = vpack.c.bf16 %v1143, %v1140
          %v1182 = vpack.c.bf16 %v1151, %v1148
          %v1183 = vpack.c.bf16 %v1159, %v1156
          %v1184 = vpack.c.bf16 %v1167, %v1164
          %v1185 = vpack.c.bf16 %v1175, %v1172
          %v1194 = vunpack.c.l.b16 %v1178
          %v1195 = vunpack.c.h.b16 %v1178
          %v1196 = vunpack.c.l.b16 %v1179
          %v1197 = vunpack.c.h.b16 %v1179
          %v1198 = vunpack.c.l.b16 %v1180
          %v1199 = vunpack.c.h.b16 %v1180
          %v1200 = vunpack.c.l.b16 %v1181
          %v1201 = vunpack.c.h.b16 %v1181
          %v1202 = vunpack.c.l.b16 %v1182
          %v1203 = vunpack.c.h.b16 %v1182
          %v1204 = vunpack.c.l.b16 %v1183
          %v1205 = vunpack.c.h.b16 %v1183
          %v1206 = vunpack.c.l.b16 %v1184
          %v1207 = vunpack.c.h.b16 %v1184
          %v1208 = vunpack.c.l.b16 %v1185
          %v1209 = vunpack.c.h.b16 %v1185
          %v1210 = vpack.c.b16 %v1194, %v1194
          %v1211 = vpack.c.b16 %v1195, %v1195
          %v1212 = vpack.c.b16 %v1196, %v1196
          %v1213 = vpack.c.b16 %v1197, %v1197
          %v1214 = vpack.c.b16 %v1198, %v1198
          %v1215 = vpack.c.b16 %v1199, %v1199
          %v1216 = vpack.c.b16 %v1200, %v1200
          %v1217 = vpack.c.b16 %v1201, %v1201
          %v1218 = vpack.c.b16 %v1202, %v1202
          %v1219 = vpack.c.b16 %v1203, %v1203
          %v1220 = vpack.c.b16 %v1204, %v1204
          %v1221 = vpack.c.b16 %v1205, %v1205
          %v1222 = vpack.c.b16 %v1206, %v1206
          %v1223 = vpack.c.b16 %v1207, %v1207
          %v1224 = vpack.c.b16 %v1208, %v1208
          %v1225 = vpack.c.b16 %v1209, %v1209
          %1242 = vst [vmem:[#allocation4] sm:$0xf] %v1210
          %1243 = vst [vmem:[#allocation4 + $0x4] sm:$0xf] %v1211
          %1244 = vst [vmem:[#allocation4 + $0x8] sm:$0xf] %v1212
          %1245 = vst [vmem:[#allocation4 + $0xc] sm:$0xf] %v1213
          %1246 = vst [vmem:[#allocation4 + $0x10] sm:$0xf] %v1214
          %1247 = vst [vmem:[#allocation4 + $0x14] sm:$0xf] %v1215
          %1248 = vst [vmem:[#allocation4 + $0x18] sm:$0xf] %v1216
          %1249 = vst [vmem:[#allocation4 + $0x1c] sm:$0xf] %v1217
          %1250 = vst [vmem:[#allocation4 + $0x20] sm:$0xf] %v1218
          %1251 = vst [vmem:[#allocation4 + $0x24] sm:$0xf] %v1219
          %1252 = vst [vmem:[#allocation4 + $0x28] sm:$0xf] %v1220
          %1253 = vst [vmem:[#allocation4 + $0x2c] sm:$0xf] %v1221
          %1254 = vst [vmem:[#allocation4 + $0x30] sm:$0xf] %v1222
          %1255 = vst [vmem:[#allocation4 + $0x34] sm:$0xf] %v1223
          %1256 = vst [vmem:[#allocation4 + $0x38] sm:$0xf] %v1224
          %1257 = vst [vmem:[#allocation4 + $0x3c] sm:$0xf] %v1225
        $region64: #{forward.1} parent=43 // pred_fallthru
          _
        // Predicated region
        $region65: #{forward.1} parent=43 // pred_check
          %p1258 = pneg %p948
        $region66: #{forward.1} parent=43 // pred_check_branch
          %1260 = sbr.rel (%p1258) target = $region68
        $region67: #{forward.1} parent=43 // pred_region
          %v1261 = vld [vmem:[#allocation5] sm:$0xf]
          %v1262 = vld [vmem:[#allocation5 + $0x4] sm:$0xf]
          %v1263 = vld [vmem:[#allocation5 + $0x8] sm:$0xf]
          %v1264 = vld [vmem:[#allocation5 + $0xc] sm:$0xf]
          %v1265 = vld [vmem:[#allocation5 + $0x10] sm:$0xf]
          %v1266 = vld [vmem:[#allocation5 + $0x14] sm:$0xf]
          %v1267 = vld [vmem:[#allocation5 + $0x18] sm:$0xf]
          %v1268 = vld [vmem:[#allocation5 + $0x1c] sm:$0xf]
          %v1269 = vld [vmem:[#allocation5 + $0x20] sm:$0xf]
          %v1270 = vld [vmem:[#allocation5 + $0x24] sm:$0xf]
          %v1271 = vld [vmem:[#allocation5 + $0x28] sm:$0xf]
          %v1272 = vld [vmem:[#allocation5 + $0x2c] sm:$0xf]
          %v1273 = vld [vmem:[#allocation5 + $0x30] sm:$0xf]
          %v1274 = vld [vmem:[#allocation5 + $0x34] sm:$0xf]
          %v1275 = vld [vmem:[#allocation5 + $0x38] sm:$0xf]
          %v1276 = vld [vmem:[#allocation5 + $0x3c] sm:$0xf]
          %v1277 = vld [vmem:[#allocation4] sm:$0xf]
          %v1278 = vld [vmem:[#allocation4 + $0x4] sm:$0xf]
          %v1279 = vld [vmem:[#allocation4 + $0x8] sm:$0xf]
          %v1280 = vld [vmem:[#allocation4 + $0xc] sm:$0xf]
          %v1281 = vld [vmem:[#allocation4 + $0x10] sm:$0xf]
          %v1282 = vld [vmem:[#allocation4 + $0x14] sm:$0xf]
          %v1283 = vld [vmem:[#allocation4 + $0x18] sm:$0xf]
          %v1284 = vld [vmem:[#allocation4 + $0x1c] sm:$0xf]
          %v1285 = vld [vmem:[#allocation4 + $0x20] sm:$0xf]
          %v1286 = vld [vmem:[#allocation4 + $0x24] sm:$0xf]
          %v1287 = vld [vmem:[#allocation4 + $0x28] sm:$0xf]
          %v1288 = vld [vmem:[#allocation4 + $0x2c] sm:$0xf]
          %v1289 = vld [vmem:[#allocation4 + $0x30] sm:$0xf]
          %v1290 = vld [vmem:[#allocation4 + $0x34] sm:$0xf]
          %v1291 = vld [vmem:[#allocation4 + $0x38] sm:$0xf]
          %v1292 = vld [vmem:[#allocation4 + $0x3c] sm:$0xf]
          %v1293 = vld [vmem:[%s5] sm:$0x1]
          %v1295 = vlaneseq
          %v1296 = vshrl.u32 %v1295, 7
          %v1297 = vsub.s32 0, %v1296
          %v1298 = vrot.slane %v1293, %v1297
          %v1316 = vunpack.c.l.b16 %v1261
          %v1317 = vunpack.c.l.b16 %v1262
          %v1318 = vunpack.c.l.b16 %v1263
          %v1319 = vunpack.c.l.b16 %v1264
          %v1320 = vunpack.c.l.b16 %v1265
          %v1321 = vunpack.c.l.b16 %v1266
          %v1322 = vunpack.c.l.b16 %v1267
          %v1323 = vunpack.c.l.b16 %v1268
          %v1324 = vunpack.c.l.b16 %v1269
          %v1325 = vunpack.c.l.b16 %v1270
          %v1326 = vunpack.c.l.b16 %v1271
          %v1327 = vunpack.c.l.b16 %v1272
          %v1328 = vunpack.c.l.b16 %v1273
          %v1329 = vunpack.c.l.b16 %v1274
          %v1330 = vunpack.c.l.b16 %v1275
          %v1331 = vunpack.c.l.b16 %v1276
          %v1332 = vpack.c.b16 %v1317, %v1316
          %v1333 = vpack.c.b16 %v1319, %v1318
          %v1334 = vpack.c.b16 %v1321, %v1320
          %v1335 = vpack.c.b16 %v1323, %v1322
          %v1336 = vpack.c.b16 %v1325, %v1324
          %v1337 = vpack.c.b16 %v1327, %v1326
          %v1338 = vpack.c.b16 %v1329, %v1328
          %v1339 = vpack.c.b16 %v1331, %v1330
          %v1364 = vunpack.c.l.b16 %v1277
          %v1365 = vunpack.c.l.b16 %v1278
          %v1366 = vunpack.c.l.b16 %v1279
          %v1367 = vunpack.c.l.b16 %v1280
          %v1368 = vunpack.c.l.b16 %v1281
          %v1369 = vunpack.c.l.b16 %v1282
          %v1370 = vunpack.c.l.b16 %v1283
          %v1371 = vunpack.c.l.b16 %v1284
          %v1372 = vunpack.c.l.b16 %v1285
          %v1373 = vunpack.c.l.b16 %v1286
          %v1374 = vunpack.c.l.b16 %v1287
          %v1375 = vunpack.c.l.b16 %v1288
          %v1376 = vunpack.c.l.b16 %v1289
          %v1377 = vunpack.c.l.b16 %v1290
          %v1378 = vunpack.c.l.b16 %v1291
          %v1379 = vunpack.c.l.b16 %v1292
          %v1380 = vpack.c.b16 %v1365, %v1364
          %v1381 = vpack.c.b16 %v1367, %v1366
          %v1382 = vpack.c.b16 %v1369, %v1368
          %v1383 = vpack.c.b16 %v1371, %v1370
          %v1384 = vpack.c.b16 %v1373, %v1372
          %v1385 = vpack.c.b16 %v1375, %v1374
          %v1386 = vpack.c.b16 %v1377, %v1376
          %v1387 = vpack.c.b16 %v1379, %v1378
          %1396 = vmatprep.subr.bf16.mxu0 0
          %1397 = vmatpush1.bf16.msra.mxu0 %v1387
          %1398 = vmatprep.subr.bf16.mxu0 0
          %1399 = vmatpush1.bf16.msra.mxu0 %v1386
          %1400 = vmatprep.subr.bf16.mxu0 0
          %1401 = vmatpush1.bf16.msra.mxu0 %v1385
          %1402 = vmatprep.subr.bf16.mxu0 0
          %1403 = vmatpush1.bf16.msra.mxu0 %v1384
          %1404 = vmatprep.subr.bf16.mxu0 0
          %1405 = vmatpush1.bf16.msra.mxu0 %v1383
          %1406 = vmatprep.subr.bf16.mxu0 0
          %1407 = vmatpush1.bf16.msra.mxu0 %v1382
          %1408 = vmatprep.subr.bf16.mxu0 0
          %1409 = vmatpush1.bf16.msra.mxu0 %v1381
          %1410 = vmatprep.subr.bf16.mxu0 0
          %1411 = vmatpush1.bf16.msra.mxu0 %v1380
          %1412 = vmatprep.subr.bf16.mxu0 0
          %1413 = vmatpush2.bf16.msra.mxu0 0
          %1414 = vmatprep.subr.bf16.mxu0 0
          %1415 = vmatpush2.bf16.msra.mxu0 0
          %1416 = vmatprep.subr.bf16.mxu0 0
          %1417 = vmatpush2.bf16.msra.mxu0 0
          %1418 = vmatprep.subr.bf16.mxu0 0
          %1419 = vmatpush2.bf16.msra.mxu0 0
          %1420 = vmatprep.subr.bf16.mxu0 0
          %1421 = vmatpush2.bf16.msra.mxu0 0
          %1422 = vmatprep.subr.bf16.mxu0 0
          %1423 = vmatpush2.bf16.msra.mxu0 0
          %1424 = vmatprep.subr.bf16.mxu0 0
          %1425 = vmatpush2.bf16.msra.mxu0 0
          %1426 = vmatprep.subr.bf16.mxu0 0
          %1427 = vmatpush2.bf16.msra.mxu0 0
          %1428 = vmatprep.mubr.bf16.mxu0 0
          %1429 = vmatmul.mubr.bf16.gmra.mxu0 %v1332
          %v1430 = vpop.f32.mrf.mxu0
          %v1431 = vadd.f32 %v1298, %v1430
          %v1432 = vpop.f32.mrf.mxu0
          %v1433 = vpop.f32.mrf.mxu0
          %v1434 = vadd.f32 %v1298, %v1433
          %v1435 = vpop.f32.mrf.mxu0
          %1436 = vmatprep.mubr.bf16.mxu0 0
          %1437 = vmatmul.mubr.bf16.gmra.mxu0 %v1333
          %v1438 = vpop.f32.mrf.mxu0
          %v1439 = vadd.f32 %v1298, %v1438
          %v1440 = vpop.f32.mrf.mxu0
          %v1441 = vpop.f32.mrf.mxu0
          %v1442 = vadd.f32 %v1298, %v1441
          %v1443 = vpop.f32.mrf.mxu0
          %1444 = vmatprep.mubr.bf16.mxu0 0
          %1445 = vmatmul.mubr.bf16.gmra.mxu0 %v1334
          %v1446 = vpop.f32.mrf.mxu0
          %v1447 = vadd.f32 %v1298, %v1446
          %v1448 = vpop.f32.mrf.mxu0
          %v1449 = vpop.f32.mrf.mxu0
          %v1450 = vadd.f32 %v1298, %v1449
          %v1451 = vpop.f32.mrf.mxu0
          %1452 = vmatprep.mubr.bf16.mxu0 0
          %1453 = vmatmul.mubr.bf16.gmra.mxu0 %v1335
          %v1454 = vpop.f32.mrf.mxu0
          %v1455 = vadd.f32 %v1298, %v1454
          %v1456 = vpop.f32.mrf.mxu0
          %v1457 = vpop.f32.mrf.mxu0
          %v1458 = vadd.f32 %v1298, %v1457
          %v1459 = vpop.f32.mrf.mxu0
          %1460 = vmatprep.mubr.bf16.mxu0 0
          %1461 = vmatmul.mubr.bf16.gmra.mxu0 %v1336
          %v1462 = vpop.f32.mrf.mxu0
          %v1463 = vadd.f32 %v1298, %v1462
          %v1464 = vpop.f32.mrf.mxu0
          %v1465 = vpop.f32.mrf.mxu0
          %v1466 = vadd.f32 %v1298, %v1465
          %v1467 = vpop.f32.mrf.mxu0
          %1468 = vmatprep.mubr.bf16.mxu0 0
          %1469 = vmatmul.mubr.bf16.gmra.mxu0 %v1337
          %v1470 = vpop.f32.mrf.mxu0
          %v1471 = vadd.f32 %v1298, %v1470
          %v1472 = vpop.f32.mrf.mxu0
          %v1473 = vpop.f32.mrf.mxu0
          %v1474 = vadd.f32 %v1298, %v1473
          %v1475 = vpop.f32.mrf.mxu0
          %1476 = vmatprep.mubr.bf16.mxu0 0
          %1477 = vmatmul.mubr.bf16.gmra.mxu0 %v1338
          %v1478 = vpop.f32.mrf.mxu0
          %v1479 = vadd.f32 %v1298, %v1478
          %v1480 = vpop.f32.mrf.mxu0
          %v1481 = vpop.f32.mrf.mxu0
          %v1482 = vadd.f32 %v1298, %v1481
          %v1483 = vpop.f32.mrf.mxu0
          %1484 = vmatprep.mubr.bf16.mxu0 0
          %1485 = vmatmul.mubr.bf16.gmra.mxu0 %v1339
          %v1486 = vpop.f32.mrf.mxu0
          %v1487 = vadd.f32 %v1298, %v1486
          %v1488 = vpop.f32.mrf.mxu0
          %v1489 = vpop.f32.mrf.mxu0
          %v1490 = vadd.f32 %v1298, %v1489
          %v1491 = vpop.f32.mrf.mxu0
          %1492 = vdwg.mxu0
          %1493 = vst [vmem:[%s282] sm:$0xff] %v1431
          %1494 = vst [vmem:[%s282 + $0x8] sm:$0xff] %v1434
          %1495 = vst [vmem:[%s282 + $0x10] sm:$0xff] %v1439
          %1496 = vst [vmem:[%s282 + $0x18] sm:$0xff] %v1442
          %1497 = vst [vmem:[%s282 + $0x20] sm:$0xff] %v1447
          %1498 = vst [vmem:[%s282 + $0x28] sm:$0xff] %v1450
          %1499 = vst [vmem:[%s282 + $0x30] sm:$0xff] %v1455
          %1500 = vst [vmem:[%s282 + $0x38] sm:$0xff] %v1458
          %1501 = vst [vmem:[%s282 + $0x40] sm:$0xff] %v1463
          %1502 = vst [vmem:[%s282 + $0x48] sm:$0xff] %v1466
          %1503 = vst [vmem:[%s282 + $0x50] sm:$0xff] %v1471
          %1504 = vst [vmem:[%s282 + $0x58] sm:$0xff] %v1474
          %1505 = vst [vmem:[%s282 + $0x60] sm:$0xff] %v1479
          %1506 = vst [vmem:[%s282 + $0x68] sm:$0xff] %v1482
          %1507 = vst [vmem:[%s282 + $0x70] sm:$0xff] %v1487
          %1508 = vst [vmem:[%s282 + $0x78] sm:$0xff] %v1490
        $region68: #{forward.1} parent=43 // pred_fallthru
          _
        %s1509 = smul.u32 16, %s24
        %p1510 = scmp.lt.s32.totalorder %s1509, 15
        %s1511 = scalar_select %p1510, %s1509, 15
        %s1512 = smul.addr %s1511, 8
        %s1513 = scalar_lea.vmem %s6, %s1512
        // Predicated region
        $region69: #{forward.1} parent=43 // pred_check
          %p1514 = pneg %p180
        $region70: #{forward.1} parent=43 // pred_check_branch
          %1516 = sbr.rel (%p1514) target = $region72
        $region71: #{forward.1} parent=43 // pred_region
          %s1517 = smul.u32 16, %s24
        $region72: #{forward.1} parent=43 // pred_fallthru
          _
        // Predicated region
        $region73: #{forward.1} parent=43 // pred_check
          %p1518 = pneg %p180
        $region74: #{forward.1} parent=43 // pred_check_branch
          %1520 = sbr.rel (%p1518) target = $region76
        $region75: #{forward.1} parent=43 // pred_region
          %s1521 = smul.u32 16, %s24
          %p1522 = scmp.lt.s32.totalorder %s1521, 15
          %s1523 = scalar_select %p1522, %s1521, 15
          %s1524 = smul.addr %s1523, 8
          %s1525 = scalar_lea.vmem %s6, %s1524
        $region76: #{forward.1} parent=43 // pred_fallthru
          _
      $region44: #{forward.1} parent=5 // pred_fallthru
        _
      %p1526 = scmp.le.s32.totalorder 2, %s14
      // Predicated region
      $region77: #{forward.1} parent=5 // pred_check
        %p1527 = pneg %p1526
      $region78: #{forward.1} parent=5 // pred_check_branch
        %1529 = sbr.rel (%p1527) target = $region80
      $region79: #{forward.1} parent=5 // pred_region
        %s1530 = ssub.s32 %s14, 2
      $region80: #{forward.1} parent=5 // pred_fallthru
        _
    $region6: #{forward.1} parent=1 // loop_footer
      %s18 = sadd.s32 1, %s14
    $region7: #{forward.1} parent=1 // loop_footer_branch
      %13 = sbr.rel target = $region3
    $region8: #{forward.1} parent=1 // loop_exit
      _
    %1531 = vsyncpa [#allocation6], 1
    %s1532 = scalar_lea.sflag [#allocation6], 1
    %1533 = vsyncpa %s1532, 1
    %1534 = vsyncpa [#allocation8], 1

</llo_original>
